<compile_context>
chip_gen: v6e
topology: v6e:2x2x1
jax: 0.10.0
libtpu: 0.0.40
codegen_flags: <defaults>
</compile_context>

<pallas_src>
import jax
import jax.numpy as jnp
from jax.experimental import pallas as pl
from jax.experimental.pallas import tpu as pltpu

# ----------------------------- config ---------------------------------------
N = 128            # number of nodes (== lane width; nodes map onto lanes)
D = 32             # in_channels == hidden_channels
HID2 = 256         # penultimate hidden
C = 8              # out_channels (num classes) -- multiple of 8, no padding needed
DA = D + 1         # augmented feature dim ([q|1], [k|1], [v|1])
BLK = 40           # sublane stride of the q/k/v blocks in the fused projection
QKV_ROWS = 128     # 3*BLK padded to a multiple of 16 (bf16 sublane tile)
ALPHA = 0.5
LN_EPS = 1e-5
BN_EPS = 1e-5
NORM_EPS = 1e-12   # guards all-zero q/k (torch.norm would give inf/NaN there)

# Weight-blob row offsets (bf16 -> keep every offset a multiple of 16).
R_W0 = 0                       # fcs[0]           [D, D]
R_QKV1 = 32                    # conv1 fused qkv  [QKV_ROWS, D]
R_QKV2 = 160                   # conv2 fused qkv  [QKV_ROWS, D]
R_WF = 288                     # folded fcs[-2]   [HID2, D]
WBLOB_ROWS = 544

# Small-vector blob: column-packed [HID2, VEC_COLS] f32 (one DMA).
COL_B0, COL_G0, COL_BE0 = 0, 1, 2
COL_BQKV1, COL_G1, COL_BE1 = 3, 4, 5
COL_BQKV2, COL_G2, COL_BE2 = 6, 7, 8
COL_BF, COL_BO = 9, 10
VEC_COLS = 16


# ----------------------------- kernel helpers --------------------------------
def _wdot(w_bf16, h):
    """MXU: [out,in] bf16 weight @ [in,N] activation (cast to bf16), f32 acc."""
    return jnp.dot(w_bf16, h.astype(jnp.bfloat16),
                   preferred_element_type=jnp.float32)


def _layernorm(h, g, b):
    """LayerNorm over the feature (sublane) axis; var = E[x^2] - mean^2 so the
    two reductions are independent (overlap on the XLU)."""
    mean = jnp.mean(h, axis=0, keepdims=True)              # [1, N]
    msq = jnp.mean(h * h, axis=0, keepdims=True)           # [1, N]
    var = msq - mean * mean
    return (h - mean) * jax.lax.rsqrt(var + LN_EPS) * g + b


def _attn_conv(h, wqkv, bqkv):
    """scGraphformerConv (num_heads=1), feature-major, fused augmented QKV.

    The projection output rows are laid out as
      [ q(0:32) | 1 | pad ... | k(40:72) | 1 | pad ... | v(80:112) | 1 | pad ]
    (the ones rows come from zero weight rows + unit bias), so one MXU push
    over [k;1] x [v;1] yields [[kvs, ks_sum], [vs_sum, N]] and a second push
    over scaled [q;1] yields attention_num(+vs_sum) and the normalizer.
    """
    qkv = _wdot(wqkv, h) + bqkv                            # [QKV_ROWS, N] f32
    q = qkv[0:D, :]                                        # [D, N]
    k = qkv[BLK:BLK + D, :]
    k_aug = qkv[BLK:BLK + DA, :]                           # [k ; 1]  [DA, N]
    v_aug = qkv[2 * BLK:2 * BLK + DA, :]                   # [v ; 1]  [DA, N]

    # Deferred Frobenius normalisation: one combined scalar, computed while the
    # kvs matmul runs (not gating the first MXU push).
    sqk = (jax.lax.rsqrt(jnp.sum(q * q) + NORM_EPS) *
           jax.lax.rsqrt(jnp.sum(k * k) + NORM_EPS))

    # kvs_aug[m, d] = sum_n k_aug[m, n] * v_aug[d, n]
    #   -> [[kvs, ks_sum], [vs_sum, N]]   (contract the node/lane axis)
    kvs_aug = jax.lax.dot_general(
        k_aug.astype(jnp.bfloat16), v_aug.astype(jnp.bfloat16),
        dimension_numbers=(((1,), (1,)), ((), ())),
        preferred_element_type=jnp.float32)                # [DA, DA]

    # Scale only the q rows (the trailing ones row keeps vs_sum / +N unscaled).
    q_s = jnp.concatenate([q * sqk, jnp.ones((1, N), jnp.float32)], axis=0)

    # out_aug[d, n] = sum_m kvs_aug[m, d] * q_s[m, n]   (transposed-LHS feed)
    out_aug = jax.lax.dot_general(
        kvs_aug.astype(jnp.bfloat16), q_s.astype(jnp.bfloat16),
        dimension_numbers=(((0,), (0,)), ((), ())),
        preferred_element_type=jnp.float32)                # [DA, N]

    num = out_aug[0:D, :]        # = qn . kvs_n + vs_sum         (feature-major)
    den = out_aug[D:DA, :]       # = qn . ks_sum_n + N           [1, N]
    return num / den             # exact divide; head-mean (H==1) is identity


# ----------------------------- kernel ----------------------------------------
def scgraphformer_kernel(x_ref, wblob_ref, wo_ref, vec_ref, out_ref):
    xT = x_ref[...]                                        # [D, N] bf16

    # --- static unpack: one weight blob + one small-vector blob ---
    w0 = wblob_ref[R_W0:R_W0 + D, :]                       # [D, D]      bf16
    wqkv1 = wblob_ref[R_QKV1:R_QKV1 + QKV_ROWS, :]         # [128, D]    bf16
    wqkv2 = wblob_ref[R_QKV2:R_QKV2 + QKV_ROWS, :]         # [128, D]    bf16
    wf = wblob_ref[R_WF:R_WF + HID2, :]                    # [HID2, D]   bf16

    b0 = vec_ref[0:D, COL_B0:COL_B0 + 1]                   # column vectors, f32
    g0 = vec_ref[0:D, COL_G0:COL_G0 + 1]
    be0 = vec_ref[0:D, COL_BE0:COL_BE0 + 1]
    bqkv1 = vec_ref[0:QKV_ROWS, COL_BQKV1:COL_BQKV1 + 1]
    g1 = vec_ref[0:D, COL_G1:COL_G1 + 1]
    be1 = vec_ref[0:D, COL_BE1:COL_BE1 + 1]
    bqkv2 = vec_ref[0:QKV_ROWS, COL_BQKV2:COL_BQKV2 + 1]
    g2 = vec_ref[0:D, COL_G2:COL_G2 + 1]
    be2 = vec_ref[0:D, COL_BE2:COL_BE2 + 1]
    bf = vec_ref[0:HID2, COL_BF:COL_BF + 1]
    bo = vec_ref[0:C, COL_BO:COL_BO + 1]

    # fcs[0] -> LayerNorm -> ReLU   (dropout = identity in eval mode)
    h = _wdot(w0, xT) + b0                                 # [D, N] f32
    h = _layernorm(h, g0, be0)
    h = jnp.maximum(h, 0.0)
    layer0 = h

    # conv layer 1 + residual + LayerNorm
    h = _attn_conv(h, wqkv1, bqkv1)
    h = ALPHA * h + (1.0 - ALPHA) * layer0
    h = _layernorm(h, g1, be1)
    layer1 = h

    # conv layer 2 + residual + LayerNorm
    h = _attn_conv(h, wqkv2, bqkv2)
    h = ALPHA * h + (1.0 - ALPHA) * layer1
    h = _layernorm(h, g2, be2)

    # fcs[-2] (eval BatchNorm folded in) -> ReLU -> fcs[-1]
    h = _wdot(wf, h) + bf                                  # [HID2, N]
    h = jnp.maximum(h, 0.0)
    out_ref[...] = _wdot(wo_ref[...], h) + bo              # [C, N] full-lane store


# ----------------------------- wrapper ----------------------------------------
def scgraphformer_forward(x, packed):
    wblob, wo, vecs = packed
    xT = x.T.astype(jnp.bfloat16)                          # feature-major, bf16
    outT = pl.pallas_call(
        scgraphformer_kernel,
        out_shape=jax.ShapeDtypeStruct((C, N), jnp.float32),
        in_specs=[pl.BlockSpec(memory_space=pltpu.MemorySpace.VMEM)] * 4,
        out_specs=pl.BlockSpec(memory_space=pltpu.MemorySpace.VMEM),
        compiler_params=pltpu.CompilerParams(vmem_limit_bytes=16 * 1024 * 1024),
    )(xT, wblob, wo, vecs)
    return outT.T                                          # [N, C] logits


# ----------------------------- params -----------------------------------------
def _linear_init(key, fan_in, fan_out):
    """PyTorch-style uniform(-1/sqrt(fan_in), 1/sqrt(fan_in)); W stored [out,in]."""
    kw, kb = jax.random.split(key)
    bound = 1.0 / (fan_in ** 0.5)
    w = jax.random.uniform(kw, (fan_out, fan_in), jnp.float32, -bound, bound)
    b = jax.random.uniform(kb, (fan_out,), jnp.float32, -bound, bound)
    return w, b


def make_params(key):
    """Original-form (unfused, unfolded) f32 parameters."""
    keys = jax.random.split(key, 13)
    p = {}
    p['w0'], p['b0'] = _linear_init(keys[0], D, D)                 # fcs[0]
    p['g0'] = jnp.ones((D,), jnp.float32)                          # bns[0] LayerNorm
    p['be0'] = jnp.zeros((D,), jnp.float32)

    p['wq1'], p['bq1'] = _linear_init(keys[1], D, D)               # conv1 (H=1)
    p['wk1'], p['bk1'] = _linear_init(keys[2], D, D)
    p['wv1'], p['bv1'] = _linear_init(keys[3], D, D)
    p['g1'] = jnp.ones((D,), jnp.float32)
    p['be1'] = jnp.zeros((D,), jnp.float32)

    p['wq2'], p['bq2'] = _linear_init(keys[4], D, D)               # conv2
    p['wk2'], p['bk2'] = _linear_init(keys[5], D, D)
    p['wv2'], p['bv2'] = _linear_init(keys[6], D, D)
    p['g2'] = jnp.ones((D,), jnp.float32)
    p['be2'] = jnp.zeros((D,), jnp.float32)

    p['wf'], p['bf'] = _linear_init(keys[7], D, HID2)              # fcs[-2]
    # BatchNorm1d(256), eval mode — non-trivial and with independent keys.
    p['bng'] = 1.0 + 0.1 * jax.random.normal(keys[8], (HID2,), jnp.float32)
    p['bnb'] = 0.1 * jax.random.normal(keys[9], (HID2,), jnp.float32)
    p['bnm'] = 0.1 * jax.random.normal(keys[10], (HID2,), jnp.float32)
    p['bnv'] = jax.random.uniform(keys[11], (HID2,), jnp.float32, 0.5, 1.5)

    p['wo'], p['bo'] = _linear_init(keys[12], HID2, C)             # fcs[-1]
    return p


def pack_params(p):
    """Host-side packing: augmented QKV fusion, BN fold, blob packing."""
    bf16 = jnp.bfloat16

    def qkv_block(wq, bq, wk, bk, wv, bv):
        w = jnp.zeros((QKV_ROWS, D), jnp.float32)
        w = w.at[0:D].set(wq)
        w = w.at[BLK:BLK + D].set(wk)
        w = w.at[2 * BLK:2 * BLK + D].set(wv)
        b = jnp.zeros((QKV_ROWS,), jnp.float32)
        b = b.at[0:D].set(bq)
        b = b.at[BLK:BLK + D].set(bk)
        b = b.at[2 * BLK:2 * BLK + D].set(bv)
        # Ones rows (zero weight row + unit bias) -> [q|1], [k|1], [v|1].
        # (The q ones-row is unused by the kernel — kept for a uniform layout.)
        b = b.at[D].set(1.0)
        b = b.at[BLK + D].set(1.0)
        b = b.at[2 * BLK + D].set(1.0)
        return w, b

    wqkv1, bqkv1 = qkv_block(p['wq1'], p['bq1'], p['wk1'], p['bk1'],
                             p['wv1'], p['bv1'])
    wqkv2, bqkv2 = qkv_block(p['wq2'], p['bq2'], p['wk2'], p['bk2'],
                             p['wv2'], p['bv2'])

    # Fold eval-mode BatchNorm into fcs[-2]:  y = ((W x + b) - m) * s * g + beta
    scale = p['bng'] * jax.lax.rsqrt(p['bnv'] + BN_EPS)            # [HID2]
    wf = p['wf'] * scale[:, None]                                  # row (out) scale
    bf_vec = (p['bf'] - p['bnm']) * scale + p['bnb']

    # One bf16 weight blob (all [*, D] weights stacked along sublanes).
    wblob = jnp.zeros((WBLOB_ROWS, D), jnp.float32)
    wblob = wblob.at[R_W0:R_W0 + D].set(p['w0'])
    wblob = wblob.at[R_QKV1:R_QKV1 + QKV_ROWS].set(wqkv1)
    wblob = wblob.at[R_QKV2:R_QKV2 + QKV_ROWS].set(wqkv2)
    wblob = wblob.at[R_WF:R_WF + HID2].set(wf)
    wblob = wblob.astype(bf16)

    wo = p['wo'].astype(bf16)                                      # [C, HID2]

    # One f32 small-vector blob: column-packed biases / LN params.
    vecs = jnp.zeros((HID2, VEC_COLS), jnp.float32)
    vecs = vecs.at[0:D, COL_B0].set(p['b0'])
    vecs = vecs.at[0:D, COL_G0].set(p['g0'])
    vecs = vecs.at[0:D, COL_BE0].set(p['be0'])
    vecs = vecs.at[0:QKV_ROWS, COL_BQKV1].set(bqkv1)
    vecs = vecs.at[0:D, COL_G1].set(p['g1'])
    vecs = vecs.at[0:D, COL_BE1].set(p['be1'])
    vecs = vecs.at[0:QKV_ROWS, COL_BQKV2].set(bqkv2)
    vecs = vecs.at[0:D, COL_G2].set(p['g2'])
    vecs = vecs.at[0:D, COL_BE2].set(p['be2'])
    vecs = vecs.at[0:HID2, COL_BF].set(bf_vec)
    vecs = vecs.at[0:C, COL_BO].set(p['bo'])

    return (wblob, wo, vecs)


# ----------------------------- reference (pure JAX) ----------------------------
def reference_forward(x, p):
    """Original (unfused, unfolded, node-major) forward, mirroring the kernel's
    bf16-at-dot precision so the comparison isolates kernel correctness."""
    bf16 = jnp.bfloat16

    def lin(a, w, b):          # a [.., in], w [out, in], b [out]
        return jnp.dot(a.astype(bf16), w.T.astype(bf16),
                       preferred_element_type=jnp.float32) + b

    def ln(h, g, b):
        mu = jnp.mean(h, -1, keepdims=True)
        var = jnp.mean((h - mu) ** 2, -1, keepdims=True)
        return (h - mu) * jax.lax.rsqrt(var + LN_EPS) * g + b

    def attn(h, wq, bq, wk, bk, wv, bv):
        q = lin(h, wq, bq)
        k = lin(h, wk, bk)
        v = lin(h, wv, bv)
        qn = q * jax.lax.rsqrt(jnp.sum(q * q) + NORM_EPS)
        kn = k * jax.lax.rsqrt(jnp.sum(k * k) + NORM_EPS)
        kvs = jnp.dot(kn.T.astype(bf16), v.astype(bf16),
                      preferred_element_type=jnp.float32)
        num = jnp.dot(qn.astype(bf16), kvs.astype(bf16),
                      preferred_element_type=jnp.float32)
        num = num + jnp.sum(v, 0, keepdims=True)
        den = jnp.sum(qn * jnp.sum(kn, 0, keepdims=True), -1,
                      keepdims=True) + h.shape[0]
        return num / den

    h = jnp.maximum(ln(lin(x, p['w0'], p['b0']), p['g0'], p['be0']), 0.0)
    l0 = h
    h = ln(ALPHA * attn(h, p['wq1'], p['bq1'], p['wk1'], p['bk1'],
                        p['wv1'], p['bv1']) + (1 - ALPHA) * l0, p['g1'], p['be1'])
    l1 = h
    h = ln(ALPHA * attn(h, p['wq2'], p['bq2'], p['wk2'], p['bk2'],
                        p['wv2'], p['bv2']) + (1 - ALPHA) * l1, p['g2'], p['be2'])
    h = lin(h, p['wf'], p['bf'])
    h = (h - p['bnm']) * jax.lax.rsqrt(p['bnv'] + BN_EPS) * p['bng'] + p['bnb']
    h = jnp.maximum(h, 0.0)
    return lin(h, p['wo'], p['bo'])


# ----------------------------- main --------------------------------------------
if __name__ == "__main__":
    key = jax.random.PRNGKey(0)
    kx, kp = jax.random.split(key)
    x = jax.random.normal(kx, (N, D), jnp.float32)         # node features [N, D]
    params = make_params(kp)
    packed = pack_params(params)

    out = scgraphformer_forward(x, packed)
    out = jax.block_until_ready(out)

    ref = reference_forward(x, params)
    assert out.shape == (N, C)
    max_err = float(jnp.max(jnp.abs(out - ref)))
    # Tolerance absorbs bf16 rounding of the fused / BN-folded weights and the
    # algebraic reassociation (deferred norm, augmented sums) vs the unfused
    # reference path; attention divide is exact.
    assert jnp.allclose(out, ref, atol=5e-2, rtol=5e-2), max_err

    print("KERNEL_OK")
</pallas_src>

<mosaic_0001>
module attributes {stable_mosaic.version = 11 : i64} {
  func.func @scgraphformer_kernel(%arg0: memref<32x128xbf16, #tpu.memory_space<vmem>>, %arg1: memref<544x32xbf16, #tpu.memory_space<vmem>>, %arg2: memref<8x256xbf16, #tpu.memory_space<vmem>>, %arg3: memref<256x16xf32, #tpu.memory_space<vmem>>, %arg4: memref<8x128xf32, #tpu.memory_space<vmem>>) attributes {dimension_semantics = [], scalar_prefetch = 0 : i64, scratch_operands = 0 : i64, tpu.core_type = #tpu.core_type<tc>} {
    %c0 = arith.constant 0 : index
    %c0_0 = arith.constant 0 : index
    %0 = vector.load %arg0[%c0, %c0_0] : memref<32x128xbf16, #tpu.memory_space<vmem>>, vector<32x128xbf16>
    %c0_1 = arith.constant 0 : index
    %c0_2 = arith.constant 0 : index
    %1 = vector.load %arg1[%c0_1, %c0_2] : memref<544x32xbf16, #tpu.memory_space<vmem>>, vector<32x32xbf16>
    %c32 = arith.constant 32 : index
    %c0_3 = arith.constant 0 : index
    %2 = vector.load %arg1[%c32, %c0_3] : memref<544x32xbf16, #tpu.memory_space<vmem>>, vector<128x32xbf16>
    %c160 = arith.constant 160 : index
    %c0_4 = arith.constant 0 : index
    %3 = vector.load %arg1[%c160, %c0_4] : memref<544x32xbf16, #tpu.memory_space<vmem>>, vector<128x32xbf16>
    %c288 = arith.constant 288 : index
    %c0_5 = arith.constant 0 : index
    %4 = vector.load %arg1[%c288, %c0_5] : memref<544x32xbf16, #tpu.memory_space<vmem>>, vector<256x32xbf16>
    %c0_6 = arith.constant 0 : index
    %c0_7 = arith.constant 0 : index
    %5 = vector.load %arg3[%c0_6, %c0_7] : memref<256x16xf32, #tpu.memory_space<vmem>>, vector<32x1xf32>
    %c0_8 = arith.constant 0 : index
    %c1 = arith.constant 1 : index
    %6 = vector.load %arg3[%c0_8, %c1] : memref<256x16xf32, #tpu.memory_space<vmem>>, vector<32x1xf32>
    %c0_9 = arith.constant 0 : index
    %c2 = arith.constant 2 : index
    %7 = vector.load %arg3[%c0_9, %c2] : memref<256x16xf32, #tpu.memory_space<vmem>>, vector<32x1xf32>
    %c0_10 = arith.constant 0 : index
    %c3 = arith.constant 3 : index
    %8 = vector.load %arg3[%c0_10, %c3] : memref<256x16xf32, #tpu.memory_space<vmem>>, vector<128x1xf32>
    %c0_11 = arith.constant 0 : index
    %c4 = arith.constant 4 : index
    %9 = vector.load %arg3[%c0_11, %c4] : memref<256x16xf32, #tpu.memory_space<vmem>>, vector<32x1xf32>
    %c0_12 = arith.constant 0 : index
    %c5 = arith.constant 5 : index
    %10 = vector.load %arg3[%c0_12, %c5] : memref<256x16xf32, #tpu.memory_space<vmem>>, vector<32x1xf32>
    %c0_13 = arith.constant 0 : index
    %c6 = arith.constant 6 : index
    %11 = vector.load %arg3[%c0_13, %c6] : memref<256x16xf32, #tpu.memory_space<vmem>>, vector<128x1xf32>
    %c0_14 = arith.constant 0 : index
    %c7 = arith.constant 7 : index
    %12 = vector.load %arg3[%c0_14, %c7] : memref<256x16xf32, #tpu.memory_space<vmem>>, vector<32x1xf32>
    %c0_15 = arith.constant 0 : index
    %c8 = arith.constant 8 : index
    %13 = vector.load %arg3[%c0_15, %c8] : memref<256x16xf32, #tpu.memory_space<vmem>>, vector<32x1xf32>
    %c0_16 = arith.constant 0 : index
    %c9 = arith.constant 9 : index
    %14 = vector.load %arg3[%c0_16, %c9] : memref<256x16xf32, #tpu.memory_space<vmem>>, vector<256x1xf32>
    %c0_17 = arith.constant 0 : index
    %c10 = arith.constant 10 : index
    %15 = vector.load %arg3[%c0_17, %c10] : memref<256x16xf32, #tpu.memory_space<vmem>>, vector<8x1xf32>
    %cst = arith.constant dense<0.000000e+00> : vector<32x128xf32>
    %16 = tpu.matmul %1, %0, %cst {dimension_numbers = #tpu.dot_dimension_numbers<[1], [0], [0], [1], [0, 0, 1, 1], [], []>} : vector<32x32xbf16>, vector<32x128xbf16>, vector<32x128xf32> -> vector<32x128xf32>
    %17 = vector.broadcast %5 : vector<32x1xf32> to vector<32x128xf32>
    %18 = arith.addf %16, %17 : vector<32x128xf32>
    %cst_18 = arith.constant dense<0.000000e+00> : vector<128xf32>
    %19 = vector.multi_reduction <add>, %18, %cst_18 [0] : vector<32x128xf32> to vector<128xf32>
    %20 = vector.shape_cast %19 : vector<128xf32> to vector<1x128xf32>
    %cst_19 = arith.constant 3.200000e+01 : f32
    %21 = vector.broadcast %cst_19 : f32 to vector<1x128xf32>
    %22 = arith.divf %20, %21 : vector<1x128xf32>
    %23 = arith.mulf %18, %18 : vector<32x128xf32>
    %cst_20 = arith.constant dense<0.000000e+00> : vector<128xf32>
    %24 = vector.multi_reduction <add>, %23, %cst_20 [0] : vector<32x128xf32> to vector<128xf32>
    %25 = vector.shape_cast %24 : vector<128xf32> to vector<1x128xf32>
    %cst_21 = arith.constant 3.200000e+01 : f32
    %26 = vector.broadcast %cst_21 : f32 to vector<1x128xf32>
    %27 = arith.divf %25, %26 : vector<1x128xf32>
    %28 = arith.mulf %22, %22 : vector<1x128xf32>
    %29 = arith.subf %27, %28 : vector<1x128xf32>
    %30 = vector.broadcast %22 : vector<1x128xf32> to vector<32x128xf32>
    %31 = arith.subf %18, %30 : vector<32x128xf32>
    %cst_22 = arith.constant 9.99999974E-6 : f32
    %32 = vector.broadcast %cst_22 : f32 to vector<1x128xf32>
    %33 = arith.addf %29, %32 : vector<1x128xf32>
    %34 = math.rsqrt %33 : vector<1x128xf32>
    %35 = vector.broadcast %34 : vector<1x128xf32> to vector<32x128xf32>
    %36 = arith.mulf %31, %35 : vector<32x128xf32>
    %37 = vector.broadcast %6 : vector<32x1xf32> to vector<32x128xf32>
    %38 = arith.mulf %36, %37 : vector<32x128xf32>
    %39 = vector.broadcast %7 : vector<32x1xf32> to vector<32x128xf32>
    %40 = arith.addf %38, %39 : vector<32x128xf32>
    %cst_23 = arith.constant 0.000000e+00 : f32
    %41 = vector.broadcast %cst_23 : f32 to vector<32x128xf32>
    %42 = arith.maximumf %40, %41 : vector<32x128xf32>
    %43 = arith.truncf %42 : vector<32x128xf32> to vector<32x128xbf16>
    %cst_24 = arith.constant dense<0.000000e+00> : vector<128x128xf32>
    %44 = tpu.matmul %2, %43, %cst_24 {dimension_numbers = #tpu.dot_dimension_numbers<[1], [0], [0], [1], [0, 0, 1, 1], [], []>} : vector<128x32xbf16>, vector<32x128xbf16>, vector<128x128xf32> -> vector<128x128xf32>
    %45 = vector.broadcast %8 : vector<128x1xf32> to vector<128x128xf32>
    %46 = arith.addf %44, %45 : vector<128x128xf32>
    %47 = vector.extract_strided_slice %46 {offsets = [0, 0], sizes = [32, 128], strides = [1, 1]} : vector<128x128xf32> to vector<32x128xf32>
    %48 = vector.extract_strided_slice %46 {offsets = [40, 0], sizes = [32, 128], strides = [1, 1]} : vector<128x128xf32> to vector<32x128xf32>
    %49 = vector.extract_strided_slice %46 {offsets = [40, 0], sizes = [33, 128], strides = [1, 1]} : vector<128x128xf32> to vector<33x128xf32>
    %50 = vector.extract_strided_slice %46 {offsets = [80, 0], sizes = [33, 128], strides = [1, 1]} : vector<128x128xf32> to vector<33x128xf32>
    %51 = arith.mulf %47, %47 : vector<32x128xf32>
    %52 = vector.shape_cast %51 : vector<32x128xf32> to vector<1x32x128xf32>
    %cst_25 = arith.constant dense<0.000000e+00> : vector<1xf32>
    %53 = vector.multi_reduction <add>, %52, %cst_25 [1, 2] : vector<1x32x128xf32> to vector<1xf32>
    %54 = vector.shape_cast %53 : vector<1xf32> to vector<1x1x1xf32>
    %55 = vector.extract %54[0, 0, 0] : f32 from vector<1x1x1xf32>
    %cst_26 = arith.constant 9.99999996E-13 : f32
    %56 = arith.addf %55, %cst_26 : f32
    %57 = math.rsqrt %56 : f32
    %58 = arith.mulf %48, %48 : vector<32x128xf32>
    %59 = vector.shape_cast %58 : vector<32x128xf32> to vector<1x32x128xf32>
    %cst_27 = arith.constant dense<0.000000e+00> : vector<1xf32>
    %60 = vector.multi_reduction <add>, %59, %cst_27 [1, 2] : vector<1x32x128xf32> to vector<1xf32>
    %61 = vector.shape_cast %60 : vector<1xf32> to vector<1x1x1xf32>
    %62 = vector.extract %61[0, 0, 0] : f32 from vector<1x1x1xf32>
    %cst_28 = arith.constant 9.99999996E-13 : f32
    %63 = arith.addf %62, %cst_28 : f32
    %64 = math.rsqrt %63 : f32
    %65 = arith.mulf %57, %64 : f32
    %66 = arith.truncf %49 : vector<33x128xf32> to vector<33x128xbf16>
    %67 = arith.truncf %50 : vector<33x128xf32> to vector<33x128xbf16>
    %cst_29 = arith.constant dense<0.000000e+00> : vector<33x33xf32>
    %68 = tpu.matmul %66, %67, %cst_29 {dimension_numbers = #tpu.dot_dimension_numbers<[1], [1], [0], [0], [0, 0, 1, 0], [], []>} : vector<33x128xbf16>, vector<33x128xbf16>, vector<33x33xf32> -> vector<33x33xf32>
    %69 = vector.broadcast %65 : f32 to vector<32x128xf32>
    %70 = arith.mulf %47, %69 : vector<32x128xf32>
    %cst_30 = arith.constant 1.000000e+00 : f32
    %71 = vector.broadcast %cst_30 : f32 to vector<1x128xf32>
    %72 = tpu.concatenate %70, %71 in 0 : vector<32x128xf32>, vector<1x128xf32> -> vector<33x128xf32>
    %73 = arith.truncf %68 : vector<33x33xf32> to vector<33x33xbf16>
    %74 = arith.truncf %72 : vector<33x128xf32> to vector<33x128xbf16>
    %cst_31 = arith.constant dense<0.000000e+00> : vector<33x128xf32>
    %75 = tpu.matmul %73, %74, %cst_31 {dimension_numbers = #tpu.dot_dimension_numbers<[0], [0], [1], [1], [0, 1, 1, 1], [], []>} : vector<33x33xbf16>, vector<33x128xbf16>, vector<33x128xf32> -> vector<33x128xf32>
    %76 = vector.extract_strided_slice %75 {offsets = [0, 0], sizes = [32, 128], strides = [1, 1]} : vector<33x128xf32> to vector<32x128xf32>
    %77 = vector.extract_strided_slice %75 {offsets = [32, 0], sizes = [1, 128], strides = [1, 1]} : vector<33x128xf32> to vector<1x128xf32>
    %78 = vector.broadcast %77 : vector<1x128xf32> to vector<32x128xf32>
    %79 = arith.divf %76, %78 : vector<32x128xf32>
    %cst_32 = arith.constant 5.000000e-01 : f32
    %80 = vector.broadcast %cst_32 : f32 to vector<32x128xf32>
    %81 = arith.mulf %80, %79 : vector<32x128xf32>
    %cst_33 = arith.constant 5.000000e-01 : f32
    %82 = vector.broadcast %cst_33 : f32 to vector<32x128xf32>
    %83 = arith.mulf %82, %42 : vector<32x128xf32>
    %84 = arith.addf %81, %83 : vector<32x128xf32>
    %cst_34 = arith.constant dense<0.000000e+00> : vector<128xf32>
    %85 = vector.multi_reduction <add>, %84, %cst_34 [0] : vector<32x128xf32> to vector<128xf32>
    %86 = vector.shape_cast %85 : vector<128xf32> to vector<1x128xf32>
    %cst_35 = arith.constant 3.200000e+01 : f32
    %87 = vector.broadcast %cst_35 : f32 to vector<1x128xf32>
    %88 = arith.divf %86, %87 : vector<1x128xf32>
    %89 = arith.mulf %84, %84 : vector<32x128xf32>
    %cst_36 = arith.constant dense<0.000000e+00> : vector<128xf32>
    %90 = vector.multi_reduction <add>, %89, %cst_36 [0] : vector<32x128xf32> to vector<128xf32>
    %91 = vector.shape_cast %90 : vector<128xf32> to vector<1x128xf32>
    %cst_37 = arith.constant 3.200000e+01 : f32
    %92 = vector.broadcast %cst_37 : f32 to vector<1x128xf32>
    %93 = arith.divf %91, %92 : vector<1x128xf32>
    %94 = arith.mulf %88, %88 : vector<1x128xf32>
    %95 = arith.subf %93, %94 : vector<1x128xf32>
    %96 = vector.broadcast %88 : vector<1x128xf32> to vector<32x128xf32>
    %97 = arith.subf %84, %96 : vector<32x128xf32>
    %cst_38 = arith.constant 9.99999974E-6 : f32
    %98 = vector.broadcast %cst_38 : f32 to vector<1x128xf32>
    %99 = arith.addf %95, %98 : vector<1x128xf32>
    %100 = math.rsqrt %99 : vector<1x128xf32>
    %101 = vector.broadcast %100 : vector<1x128xf32> to vector<32x128xf32>
    %102 = arith.mulf %97, %101 : vector<32x128xf32>
    %103 = vector.broadcast %9 : vector<32x1xf32> to vector<32x128xf32>
    %104 = arith.mulf %102, %103 : vector<32x128xf32>
    %105 = vector.broadcast %10 : vector<32x1xf32> to vector<32x128xf32>
    %106 = arith.addf %104, %105 : vector<32x128xf32>
    %107 = arith.truncf %106 : vector<32x128xf32> to vector<32x128xbf16>
    %cst_39 = arith.constant dense<0.000000e+00> : vector<128x128xf32>
    %108 = tpu.matmul %3, %107, %cst_39 {dimension_numbers = #tpu.dot_dimension_numbers<[1], [0], [0], [1], [0, 0, 1, 1], [], []>} : vector<128x32xbf16>, vector<32x128xbf16>, vector<128x128xf32> -> vector<128x128xf32>
    %109 = vector.broadcast %11 : vector<128x1xf32> to vector<128x128xf32>
    %110 = arith.addf %108, %109 : vector<128x128xf32>
    %111 = vector.extract_strided_slice %110 {offsets = [0, 0], sizes = [32, 128], strides = [1, 1]} : vector<128x128xf32> to vector<32x128xf32>
    %112 = vector.extract_strided_slice %110 {offsets = [40, 0], sizes = [32, 128], strides = [1, 1]} : vector<128x128xf32> to vector<32x128xf32>
    %113 = vector.extract_strided_slice %110 {offsets = [40, 0], sizes = [33, 128], strides = [1, 1]} : vector<128x128xf32> to vector<33x128xf32>
    %114 = vector.extract_strided_slice %110 {offsets = [80, 0], sizes = [33, 128], strides = [1, 1]} : vector<128x128xf32> to vector<33x128xf32>
    %115 = arith.mulf %111, %111 : vector<32x128xf32>
    %116 = vector.shape_cast %115 : vector<32x128xf32> to vector<1x32x128xf32>
    %cst_40 = arith.constant dense<0.000000e+00> : vector<1xf32>
    %117 = vector.multi_reduction <add>, %116, %cst_40 [1, 2] : vector<1x32x128xf32> to vector<1xf32>
    %118 = vector.shape_cast %117 : vector<1xf32> to vector<1x1x1xf32>
    %119 = vector.extract %118[0, 0, 0] : f32 from vector<1x1x1xf32>
    %cst_41 = arith.constant 9.99999996E-13 : f32
    %120 = arith.addf %119, %cst_41 : f32
    %121 = math.rsqrt %120 : f32
    %122 = arith.mulf %112, %112 : vector<32x128xf32>
    %123 = vector.shape_cast %122 : vector<32x128xf32> to vector<1x32x128xf32>
    %cst_42 = arith.constant dense<0.000000e+00> : vector<1xf32>
    %124 = vector.multi_reduction <add>, %123, %cst_42 [1, 2] : vector<1x32x128xf32> to vector<1xf32>
    %125 = vector.shape_cast %124 : vector<1xf32> to vector<1x1x1xf32>
    %126 = vector.extract %125[0, 0, 0] : f32 from vector<1x1x1xf32>
    %cst_43 = arith.constant 9.99999996E-13 : f32
    %127 = arith.addf %126, %cst_43 : f32
    %128 = math.rsqrt %127 : f32
    %129 = arith.mulf %121, %128 : f32
    %130 = arith.truncf %113 : vector<33x128xf32> to vector<33x128xbf16>
    %131 = arith.truncf %114 : vector<33x128xf32> to vector<33x128xbf16>
    %cst_44 = arith.constant dense<0.000000e+00> : vector<33x33xf32>
    %132 = tpu.matmul %130, %131, %cst_44 {dimension_numbers = #tpu.dot_dimension_numbers<[1], [1], [0], [0], [0, 0, 1, 0], [], []>} : vector<33x128xbf16>, vector<33x128xbf16>, vector<33x33xf32> -> vector<33x33xf32>
    %133 = vector.broadcast %129 : f32 to vector<32x128xf32>
    %134 = arith.mulf %111, %133 : vector<32x128xf32>
    %cst_45 = arith.constant 1.000000e+00 : f32
    %135 = vector.broadcast %cst_45 : f32 to vector<1x128xf32>
    %136 = tpu.concatenate %134, %135 in 0 : vector<32x128xf32>, vector<1x128xf32> -> vector<33x128xf32>
    %137 = arith.truncf %132 : vector<33x33xf32> to vector<33x33xbf16>
    %138 = arith.truncf %136 : vector<33x128xf32> to vector<33x128xbf16>
    %cst_46 = arith.constant dense<0.000000e+00> : vector<33x128xf32>
    %139 = tpu.matmul %137, %138, %cst_46 {dimension_numbers = #tpu.dot_dimension_numbers<[0], [0], [1], [1], [0, 1, 1, 1], [], []>} : vector<33x33xbf16>, vector<33x128xbf16>, vector<33x128xf32> -> vector<33x128xf32>
    %140 = vector.extract_strided_slice %139 {offsets = [0, 0], sizes = [32, 128], strides = [1, 1]} : vector<33x128xf32> to vector<32x128xf32>
    %141 = vector.extract_strided_slice %139 {offsets = [32, 0], sizes = [1, 128], strides = [1, 1]} : vector<33x128xf32> to vector<1x128xf32>
    %142 = vector.broadcast %141 : vector<1x128xf32> to vector<32x128xf32>
    %143 = arith.divf %140, %142 : vector<32x128xf32>
    %cst_47 = arith.constant 5.000000e-01 : f32
    %144 = vector.broadcast %cst_47 : f32 to vector<32x128xf32>
    %145 = arith.mulf %144, %143 : vector<32x128xf32>
    %cst_48 = arith.constant 5.000000e-01 : f32
    %146 = vector.broadcast %cst_48 : f32 to vector<32x128xf32>
    %147 = arith.mulf %146, %106 : vector<32x128xf32>
    %148 = arith.addf %145, %147 : vector<32x128xf32>
    %cst_49 = arith.constant dense<0.000000e+00> : vector<128xf32>
    %149 = vector.multi_reduction <add>, %148, %cst_49 [0] : vector<32x128xf32> to vector<128xf32>
    %150 = vector.shape_cast %149 : vector<128xf32> to vector<1x128xf32>
    %cst_50 = arith.constant 3.200000e+01 : f32
    %151 = vector.broadcast %cst_50 : f32 to vector<1x128xf32>
    %152 = arith.divf %150, %151 : vector<1x128xf32>
    %153 = arith.mulf %148, %148 : vector<32x128xf32>
    %cst_51 = arith.constant dense<0.000000e+00> : vector<128xf32>
    %154 = vector.multi_reduction <add>, %153, %cst_51 [0] : vector<32x128xf32> to vector<128xf32>
    %155 = vector.shape_cast %154 : vector<128xf32> to vector<1x128xf32>
    %cst_52 = arith.constant 3.200000e+01 : f32
    %156 = vector.broadcast %cst_52 : f32 to vector<1x128xf32>
    %157 = arith.divf %155, %156 : vector<1x128xf32>
    %158 = arith.mulf %152, %152 : vector<1x128xf32>
    %159 = arith.subf %157, %158 : vector<1x128xf32>
    %160 = vector.broadcast %152 : vector<1x128xf32> to vector<32x128xf32>
    %161 = arith.subf %148, %160 : vector<32x128xf32>
    %cst_53 = arith.constant 9.99999974E-6 : f32
    %162 = vector.broadcast %cst_53 : f32 to vector<1x128xf32>
    %163 = arith.addf %159, %162 : vector<1x128xf32>
    %164 = math.rsqrt %163 : vector<1x128xf32>
    %165 = vector.broadcast %164 : vector<1x128xf32> to vector<32x128xf32>
    %166 = arith.mulf %161, %165 : vector<32x128xf32>
    %167 = vector.broadcast %12 : vector<32x1xf32> to vector<32x128xf32>
    %168 = arith.mulf %166, %167 : vector<32x128xf32>
    %169 = vector.broadcast %13 : vector<32x1xf32> to vector<32x128xf32>
    %170 = arith.addf %168, %169 : vector<32x128xf32>
    %171 = arith.truncf %170 : vector<32x128xf32> to vector<32x128xbf16>
    %cst_54 = arith.constant dense<0.000000e+00> : vector<256x128xf32>
    %172 = tpu.matmul %4, %171, %cst_54 {dimension_numbers = #tpu.dot_dimension_numbers<[1], [0], [0], [1], [0, 0, 1, 1], [], []>} : vector<256x32xbf16>, vector<32x128xbf16>, vector<256x128xf32> -> vector<256x128xf32>
    %173 = vector.broadcast %14 : vector<256x1xf32> to vector<256x128xf32>
    %174 = arith.addf %172, %173 : vector<256x128xf32>
    %cst_55 = arith.constant 0.000000e+00 : f32
    %175 = vector.broadcast %cst_55 : f32 to vector<256x128xf32>
    %176 = arith.maximumf %174, %175 : vector<256x128xf32>
    %c0_56 = arith.constant 0 : index
    %c0_57 = arith.constant 0 : index
    %177 = vector.load %arg2[%c0_56, %c0_57] : memref<8x256xbf16, #tpu.memory_space<vmem>>, vector<8x256xbf16>
    %178 = arith.truncf %176 : vector<256x128xf32> to vector<256x128xbf16>
    %cst_58 = arith.constant dense<0.000000e+00> : vector<8x128xf32>
    %179 = tpu.matmul %177, %178, %cst_58 {dimension_numbers = #tpu.dot_dimension_numbers<[1], [0], [0], [1], [0, 0, 1, 1], [], []>} : vector<8x256xbf16>, vector<256x128xbf16>, vector<8x128xf32> -> vector<8x128xf32>
    %180 = vector.broadcast %15 : vector<8x1xf32> to vector<8x128xf32>
    %181 = arith.addf %179, %180 : vector<8x128xf32>
    %c0_59 = arith.constant 0 : index
    %c0_60 = arith.constant 0 : index
    %182 = vector.load %arg4[%c0_59, %c0_60] : memref<8x128xf32, #tpu.memory_space<vmem>>, vector<8x128xf32>
    tpu.vector_store %arg4[%c0_59, %c0_60], %181 {strides = array<i32>} : memref<8x128xf32, #tpu.memory_space<vmem>>, vector<8x128xf32>,
    return
  }
}

</mosaic_0001>

<llo_original>
// kernel: tpu_custom_call.1
$region0: #{tpu_custom_call.1}
  #allocation0 [shape = 'u32[]', space=smem, size = 0x4, offset = 0x4, fixed_abs, tag = 'smem constant byte address 0x4 - core index']
  #allocation1 [shape = 'u32[144,128]{1,0:T(1,128)}', space=vmem, size = 0x12000, scoped, tag = 'internal scratch']
  %s0 = inlined_call_operand.vmem [shape: bf16[32,128], index: 0, kind: input, shape index: {}]
  %s1 = inlined_call_operand.vmem [shape: bf16[544,32], index: 1, kind: input, shape index: {}]
  %s2 = inlined_call_operand.vmem [shape: bf16[8,256], index: 2, kind: input, shape index: {}]
  %s3 = inlined_call_operand.vmem [shape: f32[256,16], index: 3, kind: input, shape index: {}]
  %s4 = inlined_call_operand.hbm [shape: f32[8,128], index: 4, kind: output, shape index: {}]
  %s5 = sld [smem:[#allocation0]]
  $region26: #{tpu_custom_call.1} parent=0
    _
  %s7 = ssub.s32 1, %s5
  %s8 = scalar_select 0, %s7, %s5
  $region1: #{tpu_custom_call.1} parent=0
    #allocation2 [shape = 'u8[4096]{0}', space=vmem, size = 0x1000, scoped, tag = 'output window, operand 0, single buffered']
    #allocation3 [shape = 's32[1]{0}', space=sflag, size = 0x4, scoped, tag = 'scoped memory for tpu_custom_call.1']
    %9 = vsyncpa [#allocation3], 0
    // Predicated region
    $region2: #{tpu_custom_call.1} parent=1 // pred_check
      _
    $region3: #{tpu_custom_call.1} parent=1 // pred_check_branch
      %11 = sbr.rel (0) target = $region5
    $region4: #{tpu_custom_call.1} parent=1 // pred_region
      _
    $region5: #{tpu_custom_call.1} parent=1 // pred_fallthru
      _
    // Predicated region
    $region6: #{tpu_custom_call.1} parent=1 // pred_check
      _
    $region7: #{tpu_custom_call.1} parent=1 // pred_check_branch
      %13 = sbr.rel (0) target = $region9
    $region8: #{tpu_custom_call.1} parent=1 // pred_region
      _
    $region9: #{tpu_custom_call.1} parent=1 // pred_fallthru
      _
    // Predicated region
    $region10: #{tpu_custom_call.1} parent=1 // pred_check
      _
    $region11: #{tpu_custom_call.1} parent=1 // pred_check_branch
      %15 = sbr.rel (0) target = $region13
    $region12: #{tpu_custom_call.1} parent=1 // pred_region
      _
    $region13: #{tpu_custom_call.1} parent=1 // pred_fallthru
      _
    // Predicated region
    $region14: #{tpu_custom_call.1} parent=1 // pred_check
      _
    $region15: #{tpu_custom_call.1} parent=1 // pred_check_branch
      %17 = sbr.rel (0) target = $region17
    $region16: #{tpu_custom_call.1} parent=1 // pred_region
      _
    $region17: #{tpu_custom_call.1} parent=1 // pred_fallthru
      _
    %v19 = vld [vmem:[%s0] sm:$0xf]
    %v20 = vld [vmem:[%s0 + $0x4] sm:$0xf]
    %v21 = vld [vmem:[%s0 + $0x8] sm:$0xf]
    %v22 = vld [vmem:[%s0 + $0xc] sm:$0xf]
    %v23 = vld [vmem:[%s1] sm:$0xf]
    %v24 = vld [vmem:[%s1 + $0x4] sm:$0xf]
    %v25 = vld [vmem:[%s1 + $0x8] sm:$0xf]
    %v26 = vld [vmem:[%s1 + $0xc] sm:$0xf]
    %v27 = vld [vmem:[%s1 + $0x10] sm:$0xf]
    %v28 = vld [vmem:[%s1 + $0x14] sm:$0xf]
    %v29 = vld [vmem:[%s1 + $0x18] sm:$0xf]
    %v30 = vld [vmem:[%s1 + $0x1c] sm:$0xf]
    %v31 = vld [vmem:[%s1 + $0x20] sm:$0xf]
    %v32 = vld [vmem:[%s1 + $0x24] sm:$0xf]
    %v33 = vld [vmem:[%s1 + $0x28] sm:$0xf]
    %v34 = vld [vmem:[%s1 + $0x2c] sm:$0xf]
    %v35 = vld [vmem:[%s1 + $0x30] sm:$0xf]
    %v36 = vld [vmem:[%s1 + $0x34] sm:$0xf]
    %v37 = vld [vmem:[%s1 + $0x38] sm:$0xf]
    %v38 = vld [vmem:[%s1 + $0x3c] sm:$0xf]
    %v39 = vld [vmem:[%s1 + $0x40] sm:$0xf]
    %v40 = vld [vmem:[%s1 + $0x44] sm:$0xf]
    %v41 = vld [vmem:[%s1 + $0x48] sm:$0xf]
    %v42 = vld [vmem:[%s1 + $0x4c] sm:$0xf]
    %v43 = vld [vmem:[%s1 + $0x50] sm:$0xf]
    %v44 = vld [vmem:[%s1 + $0x54] sm:$0xf]
    %v45 = vld [vmem:[%s1 + $0x58] sm:$0xf]
    %v46 = vld [vmem:[%s1 + $0x5c] sm:$0xf]
    %v47 = vld [vmem:[%s1 + $0x60] sm:$0xf]
    %v48 = vld [vmem:[%s1 + $0x64] sm:$0xf]
    %v49 = vld [vmem:[%s1 + $0x68] sm:$0xf]
    %v50 = vld [vmem:[%s1 + $0x6c] sm:$0xf]
    %v51 = vld [vmem:[%s1 + $0x70] sm:$0xf]
    %v52 = vld [vmem:[%s1 + $0x74] sm:$0xf]
    %v53 = vld [vmem:[%s1 + $0x78] sm:$0xf]
    %v54 = vld [vmem:[%s1 + $0x7c] sm:$0xf]
    %v55 = vld [vmem:[%s1 + $0x80] sm:$0xf]
    %v56 = vld [vmem:[%s1 + $0x84] sm:$0xf]
    %v57 = vld [vmem:[%s1 + $0x88] sm:$0xf]
    %v58 = vld [vmem:[%s1 + $0x8c] sm:$0xf]
    %v59 = vld [vmem:[%s1 + $0x90] sm:$0xf]
    %v60 = vld [vmem:[%s1 + $0x94] sm:$0xf]
    %v61 = vld [vmem:[%s1 + $0x98] sm:$0xf]
    %v62 = vld [vmem:[%s1 + $0x9c] sm:$0xf]
    %v63 = vld [vmem:[%s1 + $0xa0] sm:$0xf]
    %v64 = vld [vmem:[%s1 + $0xa4] sm:$0xf]
    %v65 = vld [vmem:[%s1 + $0xa8] sm:$0xf]
    %v66 = vld [vmem:[%s1 + $0xac] sm:$0xf]
    %v67 = vld [vmem:[%s1 + $0xb0] sm:$0xf]
    %v68 = vld [vmem:[%s1 + $0xb4] sm:$0xf]
    %v69 = vld [vmem:[%s1 + $0xb8] sm:$0xf]
    %v70 = vld [vmem:[%s1 + $0xbc] sm:$0xf]
    %v71 = vld [vmem:[%s1 + $0xc0] sm:$0xf]
    %v72 = vld [vmem:[%s1 + $0xc4] sm:$0xf]
    %v73 = vld [vmem:[%s1 + $0xc8] sm:$0xf]
    %v74 = vld [vmem:[%s1 + $0xcc] sm:$0xf]
    %v75 = vld [vmem:[%s1 + $0xd0] sm:$0xf]
    %v76 = vld [vmem:[%s1 + $0xd4] sm:$0xf]
    %v77 = vld [vmem:[%s1 + $0xd8] sm:$0xf]
    %v78 = vld [vmem:[%s1 + $0xdc] sm:$0xf]
    %v79 = vld [vmem:[%s1 + $0xe0] sm:$0xf]
    %v80 = vld [vmem:[%s1 + $0xe4] sm:$0xf]
    %v81 = vld [vmem:[%s1 + $0xe8] sm:$0xf]
    %v82 = vld [vmem:[%s1 + $0xec] sm:$0xf]
    %v83 = vld [vmem:[%s1 + $0xf0] sm:$0xf]
    %v84 = vld [vmem:[%s1 + $0xf4] sm:$0xf]
    %v85 = vld [vmem:[%s1 + $0xf8] sm:$0xf]
    %v86 = vld [vmem:[%s1 + $0xfc] sm:$0xf]
    %v87 = vld [vmem:[%s1 + $0x100] sm:$0xf]
    %v88 = vld [vmem:[%s1 + $0x104] sm:$0xf]
    %v89 = vld [vmem:[%s1 + $0x108] sm:$0xf]
    %v90 = vld [vmem:[%s1 + $0x10c] sm:$0xf]
    %v91 = vld [vmem:[%s3] sm:$0xff]
    %v92 = vld [vmem:[%s3 + $0x8] sm:$0xff]
    %v93 = vld [vmem:[%s3 + $0x10] sm:$0xff]
    %v94 = vld [vmem:[%s3 + $0x18] sm:$0xff]
    %v95 = vld [vmem:[%s3 + $0x20] sm:$0xff]
    %v96 = vld [vmem:[%s3 + $0x28] sm:$0xff]
    %v97 = vld [vmem:[%s3 + $0x30] sm:$0xff]
    %v98 = vld [vmem:[%s3 + $0x38] sm:$0xff]
    %v99 = vld [vmem:[%s3 + $0x40] sm:$0xff]
    %v100 = vld [vmem:[%s3 + $0x48] sm:$0xff]
    %v101 = vld [vmem:[%s3 + $0x50] sm:$0xff]
    %v102 = vld [vmem:[%s3 + $0x58] sm:$0xff]
    %v103 = vld [vmem:[%s3 + $0x60] sm:$0xff]
    %v104 = vld [vmem:[%s3 + $0x68] sm:$0xff]
    %v105 = vld [vmem:[%s3 + $0x70] sm:$0xff]
    %v106 = vld [vmem:[%s3 + $0x78] sm:$0xff]
    %v107 = vld [vmem:[%s3 + $0x80] sm:$0xff]
    %v108 = vld [vmem:[%s3 + $0x88] sm:$0xff]
    %v109 = vld [vmem:[%s3 + $0x90] sm:$0xff]
    %v110 = vld [vmem:[%s3 + $0x98] sm:$0xff]
    %v111 = vld [vmem:[%s3 + $0xa0] sm:$0xff]
    %v112 = vld [vmem:[%s3 + $0xa8] sm:$0xff]
    %v113 = vld [vmem:[%s3 + $0xb0] sm:$0xff]
    %v114 = vld [vmem:[%s3 + $0xb8] sm:$0xff]
    %v115 = vld [vmem:[%s3 + $0xc0] sm:$0xff]
    %v116 = vld [vmem:[%s3 + $0xc8] sm:$0xff]
    %v117 = vld [vmem:[%s3 + $0xd0] sm:$0xff]
    %v118 = vld [vmem:[%s3 + $0xd8] sm:$0xff]
    %v119 = vld [vmem:[%s3 + $0xe0] sm:$0xff]
    %v120 = vld [vmem:[%s3 + $0xe8] sm:$0xff]
    %v121 = vld [vmem:[%s3 + $0xf0] sm:$0xff]
    %v122 = vld [vmem:[%s3 + $0xf8] sm:$0xff]
    %124 = vset.pattern.permute.xlu0 0
    %125 = vperm.xlu0 %124, %v91
    %v126 = vpop.permute.xlu0 %125
    %129 = vset.pattern.permute.xlu0 0
    %130 = vperm.xlu0 %129, %v92
    %v131 = vpop.permute.xlu0 %130
    %134 = vset.pattern.permute.xlu0 0
    %135 = vperm.xlu0 %134, %v93
    %v136 = vpop.permute.xlu0 %135
    %139 = vset.pattern.permute.xlu0 0
    %140 = vperm.xlu0 %139, %v94
    %v141 = vpop.permute.xlu0 %140
    %v147 = vunpack.c.l.b16 %v23
    %v148 = vunpack.c.l.b16 %v24
    %v149 = vunpack.c.l.b16 %v25
    %v150 = vunpack.c.l.b16 %v26
    %v151 = vpack.c.b16 %v148, %v147
    %v152 = vpack.c.b16 %v150, %v149
    %v157 = vunpack.c.l.b16 %v19
    %v158 = vunpack.c.l.b16 %v20
    %v159 = vunpack.c.l.b16 %v21
    %v160 = vunpack.c.l.b16 %v22
    %v161 = vpack.c.b16 %v158, %v157
    %v162 = vpack.c.b16 %v160, %v159
    %vm165 = vcmask 261120
    %v167 = vsel %vm165, %v151, 0
    %v170 = vsel %vm165, %v152, 0
    %172 = vmatprep.subr.bf16.mxu0 0
    %173 = vmatpush1.bf16.msra.mxu0 0
    %174 = vmatprep.subr.bf16.mxu0 0
    %175 = vmatpush1.bf16.msra.mxu0 0
    %176 = vmatprep.subr.bf16.mxu0 0
    %177 = vmatpush1.bf16.msra.mxu0 0
    %178 = vmatprep.subr.bf16.mxu0 0
    %179 = vmatpush1.bf16.msra.mxu0 0
    %180 = vmatprep.subr.bf16.mxu0 0
    %181 = vmatpush1.bf16.msra.mxu0 0
    %182 = vmatprep.subr.bf16.mxu0 0
    %183 = vmatpush1.bf16.msra.mxu0 0
    %184 = vmatprep.subr.bf16.mxu0 0
    %185 = vmatpush1.bf16.msra.mxu0 %v162
    %186 = vmatprep.subr.bf16.mxu0 0
    %187 = vmatpush1.bf16.msra.mxu0 %v161
    %188 = vmatprep.subr.bf16.mxu0 0
    %189 = vmatpush2.bf16.msra.mxu0 0
    %190 = vmatprep.subr.bf16.mxu0 0
    %191 = vmatpush2.bf16.msra.mxu0 0
    %192 = vmatprep.subr.bf16.mxu0 0
    %193 = vmatpush2.bf16.msra.mxu0 0
    %194 = vmatprep.subr.bf16.mxu0 0
    %195 = vmatpush2.bf16.msra.mxu0 0
    %196 = vmatprep.subr.bf16.mxu0 0
    %197 = vmatpush2.bf16.msra.mxu0 0
    %198 = vmatprep.subr.bf16.mxu0 0
    %199 = vmatpush2.bf16.msra.mxu0 0
    %200 = vmatprep.subr.bf16.mxu0 0
    %201 = vmatpush2.bf16.msra.mxu0 0
    %202 = vmatprep.subr.bf16.mxu0 0
    %203 = vmatpush2.bf16.msra.mxu0 0
    %204 = vmatprep.mubr.bf16.mxu0 0
    %205 = vmatmul.mubr.bf16.gmra.mxu0 %v167
    %v206 = vpop.f32.mrf.mxu0
    %v207 = vadd.f32 %v126, %v206
    %v208 = vpop.f32.mrf.mxu0
    %v209 = vpop.f32.mrf.mxu0
    %v210 = vadd.f32 %v131, %v209
    %v211 = vpop.f32.mrf.mxu0
    %212 = vmatprep.mubr.bf16.mxu0 0
    %213 = vmatmul.mubr.bf16.gmra.mxu0 %v170
    %v214 = vpop.f32.mrf.mxu0
    %v215 = vadd.f32 %v136, %v214
    %v216 = vpop.f32.mrf.mxu0
    %v217 = vpop.f32.mrf.mxu0
    %v218 = vadd.f32 %v141, %v217
    %v219 = vpop.f32.mrf.mxu0
    %220 = vdwg.mxu0
    %v221 = vadd.f32 %v207, %v210
    %v222 = vadd.f32 %v221, %v215
    %v223 = vadd.f32 %v222, %v218
    %v224 = vrot.slane %v223, 4
    %v225 = vadd.f32 %v223, %v224
    %v226 = vrot.slane %v225, 2
    %v227 = vadd.f32 %v225, %v226
    %v228 = vrot.slane %v227, 1
    %v229 = vadd.f32 %v227, %v228
    %v230 = vrcp.pop 32.0
    %v231 = vmul.f32 %v229, %v230
    %v232 = vmul.f32 %v207, %v207
    %v233 = vmul.f32 %v210, %v210
    %v234 = vmul.f32 %v215, %v215
    %v235 = vmul.f32 %v218, %v218
    %v236 = vadd.f32 %v232, %v233
    %v237 = vadd.f32 %v236, %v234
    %v238 = vadd.f32 %v237, %v235
    %v239 = vrot.slane %v238, 4
    %v240 = vadd.f32 %v238, %v239
    %v241 = vrot.slane %v240, 2
    %v242 = vadd.f32 %v240, %v241
    %v243 = vrot.slane %v242, 1
    %v244 = vadd.f32 %v242, %v243
    %v245 = vmul.f32 %v244, %v230
    %v246 = vmul.f32 %v231, %v231
    %v247 = vsub.f32 %v245, %v246
    %v248 = vsub.f32 %v207, %v231
    %v249 = vsub.f32 %v210, %v231
    %v250 = vsub.f32 %v215, %v231
    %v251 = vsub.f32 %v218, %v231
    %v252 = vadd.f32 %v247, 1e-05
    %v253 = vrsqrt.pop %v252
    %v254 = vmul.f32 %v248, %v253
    %v255 = vmul.f32 %v249, %v253
    %v256 = vmul.f32 %v250, %v253
    %v257 = vmul.f32 %v251, %v253
    %258 = vset.pattern.permute.xlu0 1
    %259 = vperm.xlu0 %258, %v91
    %v260 = vpop.permute.xlu0 %259
    %262 = vset.pattern.permute.xlu0 1
    %263 = vperm.xlu0 %262, %v92
    %v264 = vpop.permute.xlu0 %263
    %266 = vset.pattern.permute.xlu0 1
    %267 = vperm.xlu0 %266, %v93
    %v268 = vpop.permute.xlu0 %267
    %270 = vset.pattern.permute.xlu0 1
    %271 = vperm.xlu0 %270, %v94
    %v272 = vpop.permute.xlu0 %271
    %v274 = vmul.f32 %v254, %v260
    %v275 = vmul.f32 %v255, %v264
    %v276 = vmul.f32 %v256, %v268
    %v277 = vmul.f32 %v257, %v272
    %278 = vset.pattern.permute.xlu0 2
    %279 = vperm.xlu0 %278, %v91
    %v280 = vpop.permute.xlu0 %279
    %282 = vset.pattern.permute.xlu0 2
    %283 = vperm.xlu0 %282, %v92
    %v284 = vpop.permute.xlu0 %283
    %286 = vset.pattern.permute.xlu0 2
    %287 = vperm.xlu0 %286, %v93
    %v288 = vpop.permute.xlu0 %287
    %290 = vset.pattern.permute.xlu0 2
    %291 = vperm.xlu0 %290, %v94
    %v292 = vpop.permute.xlu0 %291
    %v294 = vadd.f32 %v274, %v280
    %v295 = vadd.f32 %v275, %v284
    %v296 = vadd.f32 %v276, %v288
    %v297 = vadd.f32 %v277, %v292
    %v298 = vmax.f32 %v294, 0.0
    %v299 = vmax.f32 %v295, 0.0
    %v300 = vmax.f32 %v296, 0.0
    %v301 = vmax.f32 %v297, 0.0
    %v302 = vpack.c.bf16 %v299, %v298
    %v303 = vpack.c.bf16 %v301, %v300
    %304 = vset.pattern.permute.xlu0 3
    %305 = vperm.xlu0 %304, %v91
    %v306 = vpop.permute.xlu0 %305
    %308 = vset.pattern.permute.xlu0 3
    %309 = vperm.xlu0 %308, %v92
    %v310 = vpop.permute.xlu0 %309
    %312 = vset.pattern.permute.xlu0 3
    %313 = vperm.xlu0 %312, %v93
    %v314 = vpop.permute.xlu0 %313
    %316 = vset.pattern.permute.xlu0 3
    %317 = vperm.xlu0 %316, %v94
    %v318 = vpop.permute.xlu0 %317
    %321 = vset.pattern.permute.xlu0 3
    %322 = vperm.xlu0 %321, %v95
    %v323 = vpop.permute.xlu0 %322
    %325 = vset.pattern.permute.xlu0 3
    %326 = vperm.xlu0 %325, %v96
    %v327 = vpop.permute.xlu0 %326
    %330 = vset.pattern.permute.xlu0 3
    %331 = vperm.xlu0 %330, %v97
    %v332 = vpop.permute.xlu0 %331
    %335 = vset.pattern.permute.xlu0 3
    %336 = vperm.xlu0 %335, %v98
    %v337 = vpop.permute.xlu0 %336
    %340 = vset.pattern.permute.xlu0 3
    %341 = vperm.xlu0 %340, %v99
    %v342 = vpop.permute.xlu0 %341
    %345 = vset.pattern.permute.xlu0 3
    %346 = vperm.xlu0 %345, %v100
    %v347 = vpop.permute.xlu0 %346
    %350 = vset.pattern.permute.xlu0 3
    %351 = vperm.xlu0 %350, %v101
    %v352 = vpop.permute.xlu0 %351
    %355 = vset.pattern.permute.xlu0 3
    %356 = vperm.xlu0 %355, %v102
    %v357 = vpop.permute.xlu0 %356
    %360 = vset.pattern.permute.xlu0 3
    %361 = vperm.xlu0 %360, %v103
    %v362 = vpop.permute.xlu0 %361
    %365 = vset.pattern.permute.xlu0 3
    %366 = vperm.xlu0 %365, %v104
    %v367 = vpop.permute.xlu0 %366
    %370 = vset.pattern.permute.xlu0 3
    %371 = vperm.xlu0 %370, %v105
    %v372 = vpop.permute.xlu0 %371
    %375 = vset.pattern.permute.xlu0 3
    %376 = vperm.xlu0 %375, %v106
    %v377 = vpop.permute.xlu0 %376
    %v394 = vunpack.c.l.b16 %v27
    %v395 = vunpack.c.l.b16 %v28
    %v396 = vunpack.c.l.b16 %v29
    %v397 = vunpack.c.l.b16 %v30
    %v398 = vunpack.c.l.b16 %v31
    %v399 = vunpack.c.l.b16 %v32
    %v400 = vunpack.c.l.b16 %v33
    %v401 = vunpack.c.l.b16 %v34
    %v402 = vunpack.c.l.b16 %v35
    %v403 = vunpack.c.l.b16 %v36
    %v404 = vunpack.c.l.b16 %v37
    %v405 = vunpack.c.l.b16 %v38
    %v406 = vunpack.c.l.b16 %v39
    %v407 = vunpack.c.l.b16 %v40
    %v408 = vunpack.c.l.b16 %v41
    %v409 = vunpack.c.l.b16 %v42
    %v410 = vpack.c.b16 %v395, %v394
    %v411 = vpack.c.b16 %v397, %v396
    %v412 = vpack.c.b16 %v399, %v398
    %v413 = vpack.c.b16 %v401, %v400
    %v414 = vpack.c.b16 %v403, %v402
    %v415 = vpack.c.b16 %v405, %v404
    %v416 = vpack.c.b16 %v407, %v406
    %v417 = vpack.c.b16 %v409, %v408
    %v419 = vsel %vm165, %v410, 0
    %v422 = vsel %vm165, %v411, 0
    %v425 = vsel %vm165, %v412, 0
    %v428 = vsel %vm165, %v413, 0
    %v431 = vsel %vm165, %v414, 0
    %v434 = vsel %vm165, %v415, 0
    %v437 = vsel %vm165, %v416, 0
    %v440 = vsel %vm165, %v417, 0
    %442 = vmatprep.subr.bf16.mxu0 0
    %443 = vmatpush1.bf16.msra.mxu0 0
    %444 = vmatprep.subr.bf16.mxu0 0
    %445 = vmatpush1.bf16.msra.mxu0 0
    %446 = vmatprep.subr.bf16.mxu0 0
    %447 = vmatpush1.bf16.msra.mxu0 0
    %448 = vmatprep.subr.bf16.mxu0 0
    %449 = vmatpush1.bf16.msra.mxu0 0
    %450 = vmatprep.subr.bf16.mxu0 0
    %451 = vmatpush1.bf16.msra.mxu0 0
    %452 = vmatprep.subr.bf16.mxu0 0
    %453 = vmatpush1.bf16.msra.mxu0 0
    %454 = vmatprep.subr.bf16.mxu0 0
    %455 = vmatpush1.bf16.msra.mxu0 %v303
    %456 = vmatprep.subr.bf16.mxu0 0
    %457 = vmatpush1.bf16.msra.mxu0 %v302
    %458 = vmatprep.subr.bf16.mxu0 0
    %459 = vmatpush2.bf16.msra.mxu0 0
    %460 = vmatprep.subr.bf16.mxu0 0
    %461 = vmatpush2.bf16.msra.mxu0 0
    %462 = vmatprep.subr.bf16.mxu0 0
    %463 = vmatpush2.bf16.msra.mxu0 0
    %464 = vmatprep.subr.bf16.mxu0 0
    %465 = vmatpush2.bf16.msra.mxu0 0
    %466 = vmatprep.subr.bf16.mxu0 0
    %467 = vmatpush2.bf16.msra.mxu0 0
    %468 = vmatprep.subr.bf16.mxu0 0
    %469 = vmatpush2.bf16.msra.mxu0 0
    %470 = vmatprep.subr.bf16.mxu0 0
    %471 = vmatpush2.bf16.msra.mxu0 0
    %472 = vmatprep.subr.bf16.mxu0 0
    %473 = vmatpush2.bf16.msra.mxu0 0
    %474 = vmatprep.mubr.bf16.mxu0 0
    %475 = vmatmul.mubr.bf16.gmra.mxu0 %v419
    %v476 = vpop.f32.mrf.mxu0
    %v477 = vadd.f32 %v306, %v476
    %v478 = vpop.f32.mrf.mxu0
    %v479 = vpop.f32.mrf.mxu0
    %v480 = vadd.f32 %v310, %v479
    %v481 = vpop.f32.mrf.mxu0
    %482 = vmatprep.mubr.bf16.mxu0 0
    %483 = vmatmul.mubr.bf16.gmra.mxu0 %v422
    %v484 = vpop.f32.mrf.mxu0
    %v485 = vadd.f32 %v314, %v484
    %v486 = vpop.f32.mrf.mxu0
    %v487 = vpop.f32.mrf.mxu0
    %v488 = vadd.f32 %v318, %v487
    %v489 = vpop.f32.mrf.mxu0
    %490 = vmatprep.mubr.bf16.mxu0 0
    %491 = vmatmul.mubr.bf16.gmra.mxu0 %v425
    %v492 = vpop.f32.mrf.mxu0
    %v493 = vpop.f32.mrf.mxu0
    %v494 = vpop.f32.mrf.mxu0
    %v495 = vadd.f32 %v327, %v494
    %v496 = vpop.f32.mrf.mxu0
    %497 = vmatprep.mubr.bf16.mxu0 0
    %498 = vmatmul.mubr.bf16.gmra.mxu0 %v428
    %v499 = vpop.f32.mrf.mxu0
    %v500 = vadd.f32 %v332, %v499
    %v501 = vpop.f32.mrf.mxu0
    %v502 = vpop.f32.mrf.mxu0
    %v503 = vadd.f32 %v337, %v502
    %v504 = vpop.f32.mrf.mxu0
    %505 = vmatprep.mubr.bf16.mxu0 0
    %506 = vmatmul.mubr.bf16.gmra.mxu0 %v431
    %v507 = vpop.f32.mrf.mxu0
    %v508 = vadd.f32 %v342, %v507
    %v509 = vpop.f32.mrf.mxu0
    %v510 = vpop.f32.mrf.mxu0
    %v511 = vadd.f32 %v347, %v510
    %v512 = vpop.f32.mrf.mxu0
    %513 = vmatprep.mubr.bf16.mxu0 0
    %514 = vmatmul.mubr.bf16.gmra.mxu0 %v434
    %v515 = vpop.f32.mrf.mxu0
    %v516 = vadd.f32 %v352, %v515
    %v517 = vpop.f32.mrf.mxu0
    %v518 = vpop.f32.mrf.mxu0
    %v519 = vadd.f32 %v357, %v518
    %v520 = vpop.f32.mrf.mxu0
    %521 = vmatprep.mubr.bf16.mxu0 0
    %522 = vmatmul.mubr.bf16.gmra.mxu0 %v437
    %v523 = vpop.f32.mrf.mxu0
    %v524 = vadd.f32 %v362, %v523
    %v525 = vpop.f32.mrf.mxu0
    %v526 = vpop.f32.mrf.mxu0
    %v527 = vadd.f32 %v367, %v526
    %v528 = vpop.f32.mrf.mxu0
    %529 = vmatprep.mubr.bf16.mxu0 0
    %530 = vmatmul.mubr.bf16.gmra.mxu0 %v440
    %v531 = vpop.f32.mrf.mxu0
    %v532 = vadd.f32 %v372, %v531
    %v533 = vpop.f32.mrf.mxu0
    %v534 = vpop.f32.mrf.mxu0
    %v535 = vpop.f32.mrf.mxu0
    %536 = vdwg.mxu0
    %v537 = vmul.f32 %v477, %v477
    %v538 = vmul.f32 %v480, %v480
    %v539 = vmul.f32 %v485, %v485
    %v540 = vmul.f32 %v488, %v488
    %v541 = vadd.f32 %v537, %v538
    %v542 = vadd.f32 %v541, %v539
    %v543 = vadd.f32 %v542, %v540
    %544 = vadd.xlane.f32.xlu0 %v543
    %v545 = vpop.xlane.xlu0 %544
    %v546 = vrot.slane %v545, 4
    %v547 = vadd.f32 %v545, %v546
    %v548 = vrot.slane %v547, 2
    %v549 = vadd.f32 %v547, %v548
    %v550 = vrot.slane %v549, 1
    %v551 = vadd.f32 %v549, %v550
    %s552 = vtos %v551
    %s553 = sadd.f32 %s552, 1e-12
    %v554 = vstv %s553
    %v555 = vrsqrt.pop %v554
    %s556 = vtos %v555
    %v557 = vmul.f32 %v495, %v495
    %v558 = vmul.f32 %v500, %v500
    %v559 = vmul.f32 %v503, %v503
    %v560 = vmul.f32 %v508, %v508
    %v561 = vadd.f32 %v557, %v558
    %v562 = vadd.f32 %v561, %v559
    %v563 = vadd.f32 %v562, %v560
    %564 = vadd.xlane.f32.xlu0 %v563
    %v565 = vpop.xlane.xlu0 %564
    %v566 = vrot.slane %v565, 4
    %v567 = vadd.f32 %v565, %v566
    %v568 = vrot.slane %v567, 2
    %v569 = vadd.f32 %v567, %v568
    %v570 = vrot.slane %v569, 1
    %v571 = vadd.f32 %v569, %v570
    %s572 = vtos %v571
    %s573 = sadd.f32 %s572, 1e-12
    %v574 = vstv %s573
    %v575 = vrsqrt.pop %v574
    %s576 = vtos %v575
    %s577 = smul.f32 %s556, %s576
    %v578 = vpack.c.bf16 %v500, %v495
    %v579 = vpack.c.bf16 %v508, %v503
    %v580 = vpack.c.bf16 %v511, %v511
    %v581 = vpack.c.bf16 %v519, %v516
    %v582 = vpack.c.bf16 %v527, %v524
    %v583 = vpack.c.bf16 %v532, %v532
    %584 = vmatprep.subr.bf16.mxu0 0
    %585 = vmatpush1.bf16.xpose.msra.mxu0 0
    %586 = vmatprep.subr.bf16.mxu0 0
    %587 = vmatpush1.bf16.xpose.msra.mxu0 0
    %588 = vmatprep.subr.bf16.mxu0 0
    %589 = vmatpush1.bf16.xpose.msra.mxu0 0
    %590 = vmatprep.subr.bf16.mxu0 0
    %591 = vmatpush1.bf16.xpose.msra.mxu0 0
    %592 = vmatprep.subr.bf16.mxu0 0
    %593 = vmatpush1.bf16.xpose.msra.mxu0 0
    %594 = vmatprep.subr.bf16.mxu0 0
    %595 = vmatpush1.bf16.xpose.msra.mxu0 %v583
    %596 = vmatprep.subr.bf16.mxu0 0
    %597 = vmatpush1.bf16.xpose.msra.mxu0 %v582
    %598 = vmatprep.subr.bf16.mxu0 0
    %599 = vmatpush1.bf16.xpose.msra.mxu0 %v581
    %600 = vmatprep.subr.bf16.mxu0 0
    %601 = vmatpush2.bf16.xpose.msra.mxu0 0
    %602 = vmatprep.subr.bf16.mxu0 0
    %603 = vmatpush2.bf16.xpose.msra.mxu0 0
    %604 = vmatprep.subr.bf16.mxu0 0
    %605 = vmatpush2.bf16.xpose.msra.mxu0 0
    %606 = vmatprep.subr.bf16.mxu0 0
    %607 = vmatpush2.bf16.xpose.msra.mxu0 0
    %608 = vmatprep.subr.bf16.mxu0 0
    %609 = vmatpush2.bf16.xpose.msra.mxu0 0
    %610 = vmatprep.subr.bf16.mxu0 0
    %611 = vmatpush2.bf16.xpose.msra.mxu0 0
    %612 = vmatprep.subr.bf16.mxu0 0
    %613 = vmatpush2.bf16.xpose.msra.mxu0 0
    %614 = vmatprep.subr.bf16.mxu0 0
    %615 = vmatpush2.bf16.xpose.msra.mxu0 0
    %616 = vmatprep.mubr.bf16.mxu0 0
    %617 = vmatmul.mubr.bf16.gmra.mxu0 %v578
    %v618 = vpop.f32.mrf.mxu0
    %v619 = vadd.f32 0.0, %v618
    %v620 = vpop.f32.mrf.mxu0
    %v621 = vpop.f32.mrf.mxu0
    %v622 = vadd.f32 0.0, %v621
    %v623 = vpop.f32.mrf.mxu0
    %624 = vmatprep.mubr.bf16.mxu0 0
    %625 = vmatmul.mubr.bf16.gmra.mxu0 %v579
    %v626 = vpop.f32.mrf.mxu0
    %v627 = vadd.f32 0.0, %v626
    %v628 = vpop.f32.mrf.mxu0
    %v629 = vpop.f32.mrf.mxu0
    %v630 = vadd.f32 0.0, %v629
    %v631 = vpop.f32.mrf.mxu0
    %632 = vmatprep.mubr.bf16.mxu0 0
    %633 = vmatmul.mubr.bf16.gmra.mxu0 %v580
    %v634 = vpop.f32.mrf.mxu0
    %v635 = vadd.f32 0.0, %v634
    %v636 = vpop.f32.mrf.mxu0
    %v637 = vpop.f32.mrf.mxu0
    %v638 = vpop.f32.mrf.mxu0
    %639 = vdwg.mxu0
    %v640 = vstv %s577
    %v641 = vmul.f32 %v477, %v640
    %v642 = vmul.f32 %v480, %v640
    %v643 = vmul.f32 %v485, %v640
    %v644 = vmul.f32 %v488, %v640
    %v645 = vpack.c.bf16 %v622, %v619
    %v646 = vpack.c.bf16 %v630, %v627
    %v647 = vpack.c.bf16 %v635, %v635
    %v648 = vpack.c.bf16 %v642, %v641
    %v649 = vpack.c.bf16 %v644, %v643
    %v650 = vpack.c.bf16 1.0, 1.0
    %651 = vxpose.xlu0.c.b16.start [1/8] %v645, 128
    %652 = vxpose.xlu0.c.b16.cont [2/8] %v646, 128
    %653 = vxpose.xlu0.c.b16.cont [3/8] %v647, 128
    %654 = vxpose.xlu0.c.b16.cont [4/8] 0, 128
    %655 = vxpose.xlu0.c.b16.cont [5/8] 0, 128
    %656 = vxpose.xlu0.c.b16.cont [6/8] 0, 128
    %657 = vxpose.xlu0.c.b16.cont [7/8] 0, 128
    %658 = vxpose.xlu0.c.b16.end [8/8] 0, 128
    %v659 = vpop.trf.xlu0
    %v660 = vpop.trf.xlu0
    %v661 = vpop.trf.xlu0
    %v662 = vpop.trf.xlu0
    %v663 = vpop.trf.xlu0
    %v664 = vpop.trf.xlu0
    %v665 = vpop.trf.xlu0
    %v666 = vpop.trf.xlu0
    %vm667 = vcmask 269312
    %v669 = vsel %vm667, %v659, 0
    %v672 = vsel %vm667, %v660, 0
    %v675 = vsel %vm667, %v661, 0
    %vm677 = vcmask 1040384
    %v678 = vsel 0, 4294967295, 65535
    %v679 = vsel %vm677, %v678, 0
    %v681 = vand.u32 %v650, %v679
    %683 = vmatprep.subr.bf16.mxu0 0
    %684 = vmatpush1.bf16.msra.mxu0 0
    %685 = vmatprep.subr.bf16.mxu0 0
    %686 = vmatpush1.bf16.msra.mxu0 0
    %687 = vmatprep.subr.bf16.mxu0 0
    %688 = vmatpush1.bf16.msra.mxu0 0
    %689 = vmatprep.subr.bf16.mxu0 0
    %690 = vmatpush1.bf16.msra.mxu0 0
    %691 = vmatprep.subr.bf16.mxu0 0
    %692 = vmatpush1.bf16.msra.mxu0 0
    %693 = vmatprep.subr.bf16.mxu0 0
    %694 = vmatpush1.bf16.msra.mxu0 %v681
    %695 = vmatprep.subr.bf16.mxu0 0
    %696 = vmatpush1.bf16.msra.mxu0 %v649
    %697 = vmatprep.subr.bf16.mxu0 0
    %698 = vmatpush1.bf16.msra.mxu0 %v648
    %699 = vmatprep.subr.bf16.mxu0 0
    %700 = vmatpush2.bf16.msra.mxu0 0
    %701 = vmatprep.subr.bf16.mxu0 0
    %702 = vmatpush2.bf16.msra.mxu0 0
    %703 = vmatprep.subr.bf16.mxu0 0
    %704 = vmatpush2.bf16.msra.mxu0 0
    %705 = vmatprep.subr.bf16.mxu0 0
    %706 = vmatpush2.bf16.msra.mxu0 0
    %707 = vmatprep.subr.bf16.mxu0 0
    %708 = vmatpush2.bf16.msra.mxu0 0
    %709 = vmatprep.subr.bf16.mxu0 0
    %710 = vmatpush2.bf16.msra.mxu0 0
    %711 = vmatprep.subr.bf16.mxu0 0
    %712 = vmatpush2.bf16.msra.mxu0 0
    %713 = vmatprep.subr.bf16.mxu0 0
    %714 = vmatpush2.bf16.msra.mxu0 0
    %715 = vmatprep.mubr.bf16.mxu0 0
    %716 = vmatmul.mubr.bf16.gmra.mxu0 %v669
    %v717 = vpop.f32.mrf.mxu0
    %v718 = vadd.f32 0.0, %v717
    %v719 = vpop.f32.mrf.mxu0
    %v720 = vpop.f32.mrf.mxu0
    %v721 = vadd.f32 0.0, %v720
    %v722 = vpop.f32.mrf.mxu0
    %723 = vmatprep.mubr.bf16.mxu0 0
    %724 = vmatmul.mubr.bf16.gmra.mxu0 %v672
    %v725 = vpop.f32.mrf.mxu0
    %v726 = vadd.f32 0.0, %v725
    %v727 = vpop.f32.mrf.mxu0
    %v728 = vpop.f32.mrf.mxu0
    %v729 = vadd.f32 0.0, %v728
    %v730 = vpop.f32.mrf.mxu0
    %731 = vmatprep.mubr.bf16.mxu0 0
    %732 = vmatmul.mubr.bf16.gmra.mxu0 %v675
    %v733 = vpop.f32.mrf.mxu0
    %v734 = vadd.f32 0.0, %v733
    %v735 = vpop.f32.mrf.mxu0
    %v736 = vpop.f32.mrf.mxu0
    %v737 = vpop.f32.mrf.mxu0
    %738 = vdwg.mxu0
    %v739 = vlaneseq
    %v740 = vshrl.u32 %v739, 7
    %v741 = vsub.s32 0, %v740
    %v742 = vrot.slane %v734, %v741
    %v743 = vrcp.pop %v742
    %v744 = vmul.f32 %v718, %v743
    %v745 = vmul.f32 %v721, %v743
    %v746 = vmul.f32 %v726, %v743
    %v747 = vmul.f32 %v729, %v743
    %v748 = vmul.f32 %v744, 0.5
    %v749 = vmul.f32 %v745, 0.5
    %v750 = vmul.f32 %v746, 0.5
    %v751 = vmul.f32 %v747, 0.5
    %v752 = vmul.f32 %v298, 0.5
    %v753 = vmul.f32 %v299, 0.5
    %v754 = vmul.f32 %v300, 0.5
    %v755 = vmul.f32 %v301, 0.5
    %v756 = vadd.f32 %v748, %v752
    %v757 = vadd.f32 %v749, %v753
    %v758 = vadd.f32 %v750, %v754
    %v759 = vadd.f32 %v751, %v755
    %v760 = vadd.f32 %v756, %v757
    %v761 = vadd.f32 %v760, %v758
    %v762 = vadd.f32 %v761, %v759
    %v763 = vrot.slane %v762, 4
    %v764 = vadd.f32 %v762, %v763
    %v765 = vrot.slane %v764, 2
    %v766 = vadd.f32 %v764, %v765
    %v767 = vrot.slane %v766, 1
    %v768 = vadd.f32 %v766, %v767
    %v769 = vmul.f32 %v768, %v230
    %v770 = vmul.f32 %v756, %v756
    %v771 = vmul.f32 %v757, %v757
    %v772 = vmul.f32 %v758, %v758
    %v773 = vmul.f32 %v759, %v759
    %v774 = vadd.f32 %v770, %v771
    %v775 = vadd.f32 %v774, %v772
    %v776 = vadd.f32 %v775, %v773
    %v777 = vrot.slane %v776, 4
    %v778 = vadd.f32 %v776, %v777
    %v779 = vrot.slane %v778, 2
    %v780 = vadd.f32 %v778, %v779
    %v781 = vrot.slane %v780, 1
    %v782 = vadd.f32 %v780, %v781
    %v783 = vmul.f32 %v782, %v230
    %v784 = vmul.f32 %v769, %v769
    %v785 = vsub.f32 %v783, %v784
    %v786 = vsub.f32 %v756, %v769
    %v787 = vsub.f32 %v757, %v769
    %v788 = vsub.f32 %v758, %v769
    %v789 = vsub.f32 %v759, %v769
    %v790 = vadd.f32 %v785, 1e-05
    %v791 = vrsqrt.pop %v790
    %v792 = vmul.f32 %v786, %v791
    %v793 = vmul.f32 %v787, %v791
    %v794 = vmul.f32 %v788, %v791
    %v795 = vmul.f32 %v789, %v791
    %796 = vset.pattern.permute.xlu0 4
    %797 = vperm.xlu0 %796, %v91
    %v798 = vpop.permute.xlu0 %797
    %800 = vset.pattern.permute.xlu0 4
    %801 = vperm.xlu0 %800, %v92
    %v802 = vpop.permute.xlu0 %801
    %804 = vset.pattern.permute.xlu0 4
    %805 = vperm.xlu0 %804, %v93
    %v806 = vpop.permute.xlu0 %805
    %808 = vset.pattern.permute.xlu0 4
    %809 = vperm.xlu0 %808, %v94
    %v810 = vpop.permute.xlu0 %809
    %v812 = vmul.f32 %v792, %v798
    %v813 = vmul.f32 %v793, %v802
    %v814 = vmul.f32 %v794, %v806
    %v815 = vmul.f32 %v795, %v810
    %816 = vset.pattern.permute.xlu0 5
    %817 = vperm.xlu0 %816, %v91
    %v818 = vpop.permute.xlu0 %817
    %820 = vset.pattern.permute.xlu0 5
    %821 = vperm.xlu0 %820, %v92
    %v822 = vpop.permute.xlu0 %821
    %824 = vset.pattern.permute.xlu0 5
    %825 = vperm.xlu0 %824, %v93
    %v826 = vpop.permute.xlu0 %825
    %828 = vset.pattern.permute.xlu0 5
    %829 = vperm.xlu0 %828, %v94
    %v830 = vpop.permute.xlu0 %829
    %v832 = vadd.f32 %v812, %v818
    %v833 = vadd.f32 %v813, %v822
    %v834 = vadd.f32 %v814, %v826
    %v835 = vadd.f32 %v815, %v830
    %v836 = vpack.c.bf16 %v833, %v832
    %v837 = vpack.c.bf16 %v835, %v834
    %838 = vset.pattern.permute.xlu0 6
    %839 = vperm.xlu0 %838, %v91
    %v840 = vpop.permute.xlu0 %839
    %842 = vset.pattern.permute.xlu0 6
    %843 = vperm.xlu0 %842, %v92
    %v844 = vpop.permute.xlu0 %843
    %846 = vset.pattern.permute.xlu0 6
    %847 = vperm.xlu0 %846, %v93
    %v848 = vpop.permute.xlu0 %847
    %850 = vset.pattern.permute.xlu0 6
    %851 = vperm.xlu0 %850, %v94
    %v852 = vpop.permute.xlu0 %851
    %854 = vset.pattern.permute.xlu0 6
    %855 = vperm.xlu0 %854, %v95
    %v856 = vpop.permute.xlu0 %855
    %857 = vset.pattern.permute.xlu0 6
    %858 = vperm.xlu0 %857, %v96
    %v859 = vpop.permute.xlu0 %858
    %861 = vset.pattern.permute.xlu0 6
    %862 = vperm.xlu0 %861, %v97
    %v863 = vpop.permute.xlu0 %862
    %865 = vset.pattern.permute.xlu0 6
    %866 = vperm.xlu0 %865, %v98
    %v867 = vpop.permute.xlu0 %866
    %869 = vset.pattern.permute.xlu0 6
    %870 = vperm.xlu0 %869, %v99
    %v871 = vpop.permute.xlu0 %870
    %873 = vset.pattern.permute.xlu0 6
    %874 = vperm.xlu0 %873, %v100
    %v875 = vpop.permute.xlu0 %874
    %877 = vset.pattern.permute.xlu0 6
    %878 = vperm.xlu0 %877, %v101
    %v879 = vpop.permute.xlu0 %878
    %881 = vset.pattern.permute.xlu0 6
    %882 = vperm.xlu0 %881, %v102
    %v883 = vpop.permute.xlu0 %882
    %885 = vset.pattern.permute.xlu0 6
    %886 = vperm.xlu0 %885, %v103
    %v887 = vpop.permute.xlu0 %886
    %889 = vset.pattern.permute.xlu0 6
    %890 = vperm.xlu0 %889, %v104
    %v891 = vpop.permute.xlu0 %890
    %893 = vset.pattern.permute.xlu0 6
    %894 = vperm.xlu0 %893, %v105
    %v895 = vpop.permute.xlu0 %894
    %897 = vset.pattern.permute.xlu0 6
    %898 = vperm.xlu0 %897, %v106
    %v899 = vpop.permute.xlu0 %898
    %v916 = vunpack.c.l.b16 %v43
    %v917 = vunpack.c.l.b16 %v44
    %v918 = vunpack.c.l.b16 %v45
    %v919 = vunpack.c.l.b16 %v46
    %v920 = vunpack.c.l.b16 %v47
    %v921 = vunpack.c.l.b16 %v48
    %v922 = vunpack.c.l.b16 %v49
    %v923 = vunpack.c.l.b16 %v50
    %v924 = vunpack.c.l.b16 %v51
    %v925 = vunpack.c.l.b16 %v52
    %v926 = vunpack.c.l.b16 %v53
    %v927 = vunpack.c.l.b16 %v54
    %v928 = vunpack.c.l.b16 %v55
    %v929 = vunpack.c.l.b16 %v56
    %v930 = vunpack.c.l.b16 %v57
    %v931 = vunpack.c.l.b16 %v58
    %v932 = vpack.c.b16 %v917, %v916
    %v933 = vpack.c.b16 %v919, %v918
    %v934 = vpack.c.b16 %v921, %v920
    %v935 = vpack.c.b16 %v923, %v922
    %v936 = vpack.c.b16 %v925, %v924
    %v937 = vpack.c.b16 %v927, %v926
    %v938 = vpack.c.b16 %v929, %v928
    %v939 = vpack.c.b16 %v931, %v930
    %v941 = vsel %vm165, %v932, 0
    %v944 = vsel %vm165, %v933, 0
    %v947 = vsel %vm165, %v934, 0
    %v950 = vsel %vm165, %v935, 0
    %v953 = vsel %vm165, %v936, 0
    %v956 = vsel %vm165, %v937, 0
    %v959 = vsel %vm165, %v938, 0
    %v962 = vsel %vm165, %v939, 0
    %964 = vmatprep.subr.bf16.mxu0 0
    %965 = vmatpush1.bf16.msra.mxu0 0
    %966 = vmatprep.subr.bf16.mxu0 0
    %967 = vmatpush1.bf16.msra.mxu0 0
    %968 = vmatprep.subr.bf16.mxu0 0
    %969 = vmatpush1.bf16.msra.mxu0 0
    %970 = vmatprep.subr.bf16.mxu0 0
    %971 = vmatpush1.bf16.msra.mxu0 0
    %972 = vmatprep.subr.bf16.mxu0 0
    %973 = vmatpush1.bf16.msra.mxu0 0
    %974 = vmatprep.subr.bf16.mxu0 0
    %975 = vmatpush1.bf16.msra.mxu0 0
    %976 = vmatprep.subr.bf16.mxu0 0
    %977 = vmatpush1.bf16.msra.mxu0 %v837
    %978 = vmatprep.subr.bf16.mxu0 0
    %979 = vmatpush1.bf16.msra.mxu0 %v836
    %980 = vmatprep.subr.bf16.mxu0 0
    %981 = vmatpush2.bf16.msra.mxu0 0
    %982 = vmatprep.subr.bf16.mxu0 0
    %983 = vmatpush2.bf16.msra.mxu0 0
    %984 = vmatprep.subr.bf16.mxu0 0
    %985 = vmatpush2.bf16.msra.mxu0 0
    %986 = vmatprep.subr.bf16.mxu0 0
    %987 = vmatpush2.bf16.msra.mxu0 0
    %988 = vmatprep.subr.bf16.mxu0 0
    %989 = vmatpush2.bf16.msra.mxu0 0
    %990 = vmatprep.subr.bf16.mxu0 0
    %991 = vmatpush2.bf16.msra.mxu0 0
    %992 = vmatprep.subr.bf16.mxu0 0
    %993 = vmatpush2.bf16.msra.mxu0 0
    %994 = vmatprep.subr.bf16.mxu0 0
    %995 = vmatpush2.bf16.msra.mxu0 0
    %996 = vmatprep.mubr.bf16.mxu0 0
    %997 = vmatmul.mubr.bf16.gmra.mxu0 %v941
    %v998 = vpop.f32.mrf.mxu0
    %v999 = vadd.f32 %v840, %v998
    %v1000 = vpop.f32.mrf.mxu0
    %v1001 = vpop.f32.mrf.mxu0
    %v1002 = vadd.f32 %v844, %v1001
    %v1003 = vpop.f32.mrf.mxu0
    %1004 = vmatprep.mubr.bf16.mxu0 0
    %1005 = vmatmul.mubr.bf16.gmra.mxu0 %v944
    %v1006 = vpop.f32.mrf.mxu0
    %v1007 = vadd.f32 %v848, %v1006
    %v1008 = vpop.f32.mrf.mxu0
    %v1009 = vpop.f32.mrf.mxu0
    %v1010 = vadd.f32 %v852, %v1009
    %v1011 = vpop.f32.mrf.mxu0
    %1012 = vmatprep.mubr.bf16.mxu0 0
    %1013 = vmatmul.mubr.bf16.gmra.mxu0 %v947
    %v1014 = vpop.f32.mrf.mxu0
    %v1015 = vpop.f32.mrf.mxu0
    %v1016 = vpop.f32.mrf.mxu0
    %v1017 = vadd.f32 %v859, %v1016
    %v1018 = vpop.f32.mrf.mxu0
    %1019 = vmatprep.mubr.bf16.mxu0 0
    %1020 = vmatmul.mubr.bf16.gmra.mxu0 %v950
    %v1021 = vpop.f32.mrf.mxu0
    %v1022 = vadd.f32 %v863, %v1021
    %v1023 = vpop.f32.mrf.mxu0
    %v1024 = vpop.f32.mrf.mxu0
    %v1025 = vadd.f32 %v867, %v1024
    %v1026 = vpop.f32.mrf.mxu0
    %1027 = vmatprep.mubr.bf16.mxu0 0
    %1028 = vmatmul.mubr.bf16.gmra.mxu0 %v953
    %v1029 = vpop.f32.mrf.mxu0
    %v1030 = vadd.f32 %v871, %v1029
    %v1031 = vpop.f32.mrf.mxu0
    %v1032 = vpop.f32.mrf.mxu0
    %v1033 = vadd.f32 %v875, %v1032
    %v1034 = vpop.f32.mrf.mxu0
    %1035 = vmatprep.mubr.bf16.mxu0 0
    %1036 = vmatmul.mubr.bf16.gmra.mxu0 %v956
    %v1037 = vpop.f32.mrf.mxu0
    %v1038 = vadd.f32 %v879, %v1037
    %v1039 = vpop.f32.mrf.mxu0
    %v1040 = vpop.f32.mrf.mxu0
    %v1041 = vadd.f32 %v883, %v1040
    %v1042 = vpop.f32.mrf.mxu0
    %1043 = vmatprep.mubr.bf16.mxu0 0
    %1044 = vmatmul.mubr.bf16.gmra.mxu0 %v959
    %v1045 = vpop.f32.mrf.mxu0
    %v1046 = vadd.f32 %v887, %v1045
    %v1047 = vpop.f32.mrf.mxu0
    %v1048 = vpop.f32.mrf.mxu0
    %v1049 = vadd.f32 %v891, %v1048
    %v1050 = vpop.f32.mrf.mxu0
    %1051 = vmatprep.mubr.bf16.mxu0 0
    %1052 = vmatmul.mubr.bf16.gmra.mxu0 %v962
    %v1053 = vpop.f32.mrf.mxu0
    %v1054 = vadd.f32 %v895, %v1053
    %v1055 = vpop.f32.mrf.mxu0
    %v1056 = vpop.f32.mrf.mxu0
    %v1057 = vpop.f32.mrf.mxu0
    %1058 = vdwg.mxu0
    %v1059 = vmul.f32 %v999, %v999
    %v1060 = vmul.f32 %v1002, %v1002
    %v1061 = vmul.f32 %v1007, %v1007
    %v1062 = vmul.f32 %v1010, %v1010
    %v1063 = vadd.f32 %v1059, %v1060
    %v1064 = vadd.f32 %v1063, %v1061
    %v1065 = vadd.f32 %v1064, %v1062
    %1066 = vadd.xlane.f32.xlu0 %v1065
    %v1067 = vpop.xlane.xlu0 %1066
    %v1068 = vrot.slane %v1067, 4
    %v1069 = vadd.f32 %v1067, %v1068
    %v1070 = vrot.slane %v1069, 2
    %v1071 = vadd.f32 %v1069, %v1070
    %v1072 = vrot.slane %v1071, 1
    %v1073 = vadd.f32 %v1071, %v1072
    %s1074 = vtos %v1073
    %s1075 = sadd.f32 %s1074, 1e-12
    %v1076 = vstv %s1075
    %v1077 = vrsqrt.pop %v1076
    %s1078 = vtos %v1077
    %v1079 = vmul.f32 %v1017, %v1017
    %v1080 = vmul.f32 %v1022, %v1022
    %v1081 = vmul.f32 %v1025, %v1025
    %v1082 = vmul.f32 %v1030, %v1030
    %v1083 = vadd.f32 %v1079, %v1080
    %v1084 = vadd.f32 %v1083, %v1081
    %v1085 = vadd.f32 %v1084, %v1082
    %1086 = vadd.xlane.f32.xlu0 %v1085
    %v1087 = vpop.xlane.xlu0 %1086
    %v1088 = vrot.slane %v1087, 4
    %v1089 = vadd.f32 %v1087, %v1088
    %v1090 = vrot.slane %v1089, 2
    %v1091 = vadd.f32 %v1089, %v1090
    %v1092 = vrot.slane %v1091, 1
    %v1093 = vadd.f32 %v1091, %v1092
    %s1094 = vtos %v1093
    %s1095 = sadd.f32 %s1094, 1e-12
    %v1096 = vstv %s1095
    %v1097 = vrsqrt.pop %v1096
    %s1098 = vtos %v1097
    %s1099 = smul.f32 %s1078, %s1098
    %v1100 = vpack.c.bf16 %v1022, %v1017
    %v1101 = vpack.c.bf16 %v1030, %v1025
    %v1102 = vpack.c.bf16 %v1033, %v1033
    %v1103 = vpack.c.bf16 %v1041, %v1038
    %v1104 = vpack.c.bf16 %v1049, %v1046
    %v1105 = vpack.c.bf16 %v1054, %v1054
    %1106 = vmatprep.subr.bf16.mxu0 0
    %1107 = vmatpush1.bf16.xpose.msra.mxu0 0
    %1108 = vmatprep.subr.bf16.mxu0 0
    %1109 = vmatpush1.bf16.xpose.msra.mxu0 0
    %1110 = vmatprep.subr.bf16.mxu0 0
    %1111 = vmatpush1.bf16.xpose.msra.mxu0 0
    %1112 = vmatprep.subr.bf16.mxu0 0
    %1113 = vmatpush1.bf16.xpose.msra.mxu0 0
    %1114 = vmatprep.subr.bf16.mxu0 0
    %1115 = vmatpush1.bf16.xpose.msra.mxu0 0
    %1116 = vmatprep.subr.bf16.mxu0 0
    %1117 = vmatpush1.bf16.xpose.msra.mxu0 %v1105
    %1118 = vmatprep.subr.bf16.mxu0 0
    %1119 = vmatpush1.bf16.xpose.msra.mxu0 %v1104
    %1120 = vmatprep.subr.bf16.mxu0 0
    %1121 = vmatpush1.bf16.xpose.msra.mxu0 %v1103
    %1122 = vmatprep.subr.bf16.mxu0 0
    %1123 = vmatpush2.bf16.xpose.msra.mxu0 0
    %1124 = vmatprep.subr.bf16.mxu0 0
    %1125 = vmatpush2.bf16.xpose.msra.mxu0 0
    %1126 = vmatprep.subr.bf16.mxu0 0
    %1127 = vmatpush2.bf16.xpose.msra.mxu0 0
    %1128 = vmatprep.subr.bf16.mxu0 0
    %1129 = vmatpush2.bf16.xpose.msra.mxu0 0
    %1130 = vmatprep.subr.bf16.mxu0 0
    %1131 = vmatpush2.bf16.xpose.msra.mxu0 0
    %1132 = vmatprep.subr.bf16.mxu0 0
    %1133 = vmatpush2.bf16.xpose.msra.mxu0 0
    %1134 = vmatprep.subr.bf16.mxu0 0
    %1135 = vmatpush2.bf16.xpose.msra.mxu0 0
    %1136 = vmatprep.subr.bf16.mxu0 0
    %1137 = vmatpush2.bf16.xpose.msra.mxu0 0
    %1138 = vmatprep.mubr.bf16.mxu0 0
    %1139 = vmatmul.mubr.bf16.gmra.mxu0 %v1100
    %v1140 = vpop.f32.mrf.mxu0
    %v1141 = vadd.f32 0.0, %v1140
    %v1142 = vpop.f32.mrf.mxu0
    %v1143 = vpop.f32.mrf.mxu0
    %v1144 = vadd.f32 0.0, %v1143
    %v1145 = vpop.f32.mrf.mxu0
    %1146 = vmatprep.mubr.bf16.mxu0 0
    %1147 = vmatmul.mubr.bf16.gmra.mxu0 %v1101
    %v1148 = vpop.f32.mrf.mxu0
    %v1149 = vadd.f32 0.0, %v1148
    %v1150 = vpop.f32.mrf.mxu0
    %v1151 = vpop.f32.mrf.mxu0
    %v1152 = vadd.f32 0.0, %v1151
    %v1153 = vpop.f32.mrf.mxu0
    %1154 = vmatprep.mubr.bf16.mxu0 0
    %1155 = vmatmul.mubr.bf16.gmra.mxu0 %v1102
    %v1156 = vpop.f32.mrf.mxu0
    %v1157 = vadd.f32 0.0, %v1156
    %v1158 = vpop.f32.mrf.mxu0
    %v1159 = vpop.f32.mrf.mxu0
    %v1160 = vpop.f32.mrf.mxu0
    %1161 = vdwg.mxu0
    %v1162 = vstv %s1099
    %v1163 = vmul.f32 %v999, %v1162
    %v1164 = vmul.f32 %v1002, %v1162
    %v1165 = vmul.f32 %v1007, %v1162
    %v1166 = vmul.f32 %v1010, %v1162
    %v1167 = vpack.c.bf16 %v1144, %v1141
    %v1168 = vpack.c.bf16 %v1152, %v1149
    %v1169 = vpack.c.bf16 %v1157, %v1157
    %v1170 = vpack.c.bf16 %v1164, %v1163
    %v1171 = vpack.c.bf16 %v1166, %v1165
    %1172 = vxpose.xlu0.c.b16.start [1/8] %v1167, 128
    %1173 = vxpose.xlu0.c.b16.cont [2/8] %v1168, 128
    %1174 = vxpose.xlu0.c.b16.cont [3/8] %v1169, 128
    %1175 = vxpose.xlu0.c.b16.cont [4/8] 0, 128
    %1176 = vxpose.xlu0.c.b16.cont [5/8] 0, 128
    %1177 = vxpose.xlu0.c.b16.cont [6/8] 0, 128
    %1178 = vxpose.xlu0.c.b16.cont [7/8] 0, 128
    %1179 = vxpose.xlu0.c.b16.end [8/8] 0, 128
    %v1180 = vpop.trf.xlu0
    %v1181 = vpop.trf.xlu0
    %v1182 = vpop.trf.xlu0
    %v1183 = vpop.trf.xlu0
    %v1184 = vpop.trf.xlu0
    %v1185 = vpop.trf.xlu0
    %v1186 = vpop.trf.xlu0
    %v1187 = vpop.trf.xlu0
    %v1189 = vsel %vm667, %v1180, 0
    %v1192 = vsel %vm667, %v1181, 0
    %v1195 = vsel %vm667, %v1182, 0
    %1197 = vmatprep.subr.bf16.mxu0 0
    %1198 = vmatpush1.bf16.msra.mxu0 0
    %1199 = vmatprep.subr.bf16.mxu0 0
    %1200 = vmatpush1.bf16.msra.mxu0 0
    %1201 = vmatprep.subr.bf16.mxu0 0
    %1202 = vmatpush1.bf16.msra.mxu0 0
    %1203 = vmatprep.subr.bf16.mxu0 0
    %1204 = vmatpush1.bf16.msra.mxu0 0
    %1205 = vmatprep.subr.bf16.mxu0 0
    %1206 = vmatpush1.bf16.msra.mxu0 0
    %1207 = vmatprep.subr.bf16.mxu0 0
    %1208 = vmatpush1.bf16.msra.mxu0 %v681
    %1209 = vmatprep.subr.bf16.mxu0 0
    %1210 = vmatpush1.bf16.msra.mxu0 %v1171
    %1211 = vmatprep.subr.bf16.mxu0 0
    %1212 = vmatpush1.bf16.msra.mxu0 %v1170
    %1213 = vmatprep.subr.bf16.mxu0 0
    %1214 = vmatpush2.bf16.msra.mxu0 0
    %1215 = vmatprep.subr.bf16.mxu0 0
    %1216 = vmatpush2.bf16.msra.mxu0 0
    %1217 = vmatprep.subr.bf16.mxu0 0
    %1218 = vmatpush2.bf16.msra.mxu0 0
    %1219 = vmatprep.subr.bf16.mxu0 0
    %1220 = vmatpush2.bf16.msra.mxu0 0
    %1221 = vmatprep.subr.bf16.mxu0 0
    %1222 = vmatpush2.bf16.msra.mxu0 0
    %1223 = vmatprep.subr.bf16.mxu0 0
    %1224 = vmatpush2.bf16.msra.mxu0 0
    %1225 = vmatprep.subr.bf16.mxu0 0
    %1226 = vmatpush2.bf16.msra.mxu0 0
    %1227 = vmatprep.subr.bf16.mxu0 0
    %1228 = vmatpush2.bf16.msra.mxu0 0
    %1229 = vmatprep.mubr.bf16.mxu0 0
    %1230 = vmatmul.mubr.bf16.gmra.mxu0 %v1189
    %v1231 = vpop.f32.mrf.mxu0
    %v1232 = vadd.f32 0.0, %v1231
    %v1233 = vpop.f32.mrf.mxu0
    %v1234 = vpop.f32.mrf.mxu0
    %v1235 = vadd.f32 0.0, %v1234
    %v1236 = vpop.f32.mrf.mxu0
    %1237 = vmatprep.mubr.bf16.mxu0 0
    %1238 = vmatmul.mubr.bf16.gmra.mxu0 %v1192
    %v1239 = vpop.f32.mrf.mxu0
    %v1240 = vadd.f32 0.0, %v1239
    %v1241 = vpop.f32.mrf.mxu0
    %v1242 = vpop.f32.mrf.mxu0
    %v1243 = vadd.f32 0.0, %v1242
    %v1244 = vpop.f32.mrf.mxu0
    %1245 = vmatprep.mubr.bf16.mxu0 0
    %1246 = vmatmul.mubr.bf16.gmra.mxu0 %v1195
    %v1247 = vpop.f32.mrf.mxu0
    %v1248 = vadd.f32 0.0, %v1247
    %v1249 = vpop.f32.mrf.mxu0
    %v1250 = vpop.f32.mrf.mxu0
    %v1251 = vpop.f32.mrf.mxu0
    %1252 = vdwg.mxu0
    %v1253 = vlaneseq
    %v1254 = vshrl.u32 %v1253, 7
    %v1255 = vsub.s32 0, %v1254
    %v1256 = vrot.slane %v1248, %v1255
    %v1257 = vrcp.pop %v1256
    %v1258 = vmul.f32 %v1232, %v1257
    %v1259 = vmul.f32 %v1235, %v1257
    %v1260 = vmul.f32 %v1240, %v1257
    %v1261 = vmul.f32 %v1243, %v1257
    %v1262 = vmul.f32 %v1258, 0.5
    %v1263 = vmul.f32 %v1259, 0.5
    %v1264 = vmul.f32 %v1260, 0.5
    %v1265 = vmul.f32 %v1261, 0.5
    %v1266 = vmul.f32 %v832, 0.5
    %v1267 = vmul.f32 %v833, 0.5
    %v1268 = vmul.f32 %v834, 0.5
    %v1269 = vmul.f32 %v835, 0.5
    %v1270 = vadd.f32 %v1262, %v1266
    %v1271 = vadd.f32 %v1263, %v1267
    %v1272 = vadd.f32 %v1264, %v1268
    %v1273 = vadd.f32 %v1265, %v1269
    %v1274 = vadd.f32 %v1270, %v1271
    %v1275 = vadd.f32 %v1274, %v1272
    %v1276 = vadd.f32 %v1275, %v1273
    %v1277 = vrot.slane %v1276, 4
    %v1278 = vadd.f32 %v1276, %v1277
    %v1279 = vrot.slane %v1278, 2
    %v1280 = vadd.f32 %v1278, %v1279
    %v1281 = vrot.slane %v1280, 1
    %v1282 = vadd.f32 %v1280, %v1281
    %v1283 = vmul.f32 %v1282, %v230
    %v1284 = vmul.f32 %v1270, %v1270
    %v1285 = vmul.f32 %v1271, %v1271
    %v1286 = vmul.f32 %v1272, %v1272
    %v1287 = vmul.f32 %v1273, %v1273
    %v1288 = vadd.f32 %v1284, %v1285
    %v1289 = vadd.f32 %v1288, %v1286
    %v1290 = vadd.f32 %v1289, %v1287
    %v1291 = vrot.slane %v1290, 4
    %v1292 = vadd.f32 %v1290, %v1291
    %v1293 = vrot.slane %v1292, 2
    %v1294 = vadd.f32 %v1292, %v1293
    %v1295 = vrot.slane %v1294, 1
    %v1296 = vadd.f32 %v1294, %v1295
    %v1297 = vmul.f32 %v1296, %v230
    %v1298 = vmul.f32 %v1283, %v1283
    %v1299 = vsub.f32 %v1297, %v1298
    %v1300 = vsub.f32 %v1270, %v1283
    %v1301 = vsub.f32 %v1271, %v1283
    %v1302 = vsub.f32 %v1272, %v1283
    %v1303 = vsub.f32 %v1273, %v1283
    %v1304 = vadd.f32 %v1299, 1e-05
    %v1305 = vrsqrt.pop %v1304
    %v1306 = vmul.f32 %v1300, %v1305
    %v1307 = vmul.f32 %v1301, %v1305
    %v1308 = vmul.f32 %v1302, %v1305
    %v1309 = vmul.f32 %v1303, %v1305
    %1310 = vset.pattern.permute.xlu0 7
    %1311 = vperm.xlu0 %1310, %v91
    %v1312 = vpop.permute.xlu0 %1311
    %1314 = vset.pattern.permute.xlu0 7
    %1315 = vperm.xlu0 %1314, %v92
    %v1316 = vpop.permute.xlu0 %1315
    %1318 = vset.pattern.permute.xlu0 7
    %1319 = vperm.xlu0 %1318, %v93
    %v1320 = vpop.permute.xlu0 %1319
    %1322 = vset.pattern.permute.xlu0 7
    %1323 = vperm.xlu0 %1322, %v94
    %v1324 = vpop.permute.xlu0 %1323
    %v1326 = vmul.f32 %v1306, %v1312
    %v1327 = vmul.f32 %v1307, %v1316
    %v1328 = vmul.f32 %v1308, %v1320
    %v1329 = vmul.f32 %v1309, %v1324
    %1330 = vset.pattern.permute.xlu0 8
    %1331 = vperm.xlu0 %1330, %v91
    %v1332 = vpop.permute.xlu0 %1331
    %1334 = vset.pattern.permute.xlu0 8
    %1335 = vperm.xlu0 %1334, %v92
    %v1336 = vpop.permute.xlu0 %1335
    %1338 = vset.pattern.permute.xlu0 8
    %1339 = vperm.xlu0 %1338, %v93
    %v1340 = vpop.permute.xlu0 %1339
    %1342 = vset.pattern.permute.xlu0 8
    %1343 = vperm.xlu0 %1342, %v94
    %v1344 = vpop.permute.xlu0 %1343
    %v1346 = vadd.f32 %v1326, %v1332
    %v1347 = vadd.f32 %v1327, %v1336
    %v1348 = vadd.f32 %v1328, %v1340
    %v1349 = vadd.f32 %v1329, %v1344
    %v1350 = vpack.c.bf16 %v1347, %v1346
    %v1351 = vpack.c.bf16 %v1349, %v1348
    %1352 = vset.pattern.permute.xlu0 9
    %1353 = vperm.xlu0 %1352, %v91
    %v1354 = vpop.permute.xlu0 %1353
    %1356 = vset.pattern.permute.xlu0 9
    %1357 = vperm.xlu0 %1356, %v92
    %v1358 = vpop.permute.xlu0 %1357
    %1360 = vset.pattern.permute.xlu0 9
    %1361 = vperm.xlu0 %1360, %v93
    %v1362 = vpop.permute.xlu0 %1361
    %1364 = vset.pattern.permute.xlu0 9
    %1365 = vperm.xlu0 %1364, %v94
    %v1366 = vpop.permute.xlu0 %1365
    %1368 = vset.pattern.permute.xlu0 9
    %1369 = vperm.xlu0 %1368, %v95
    %v1370 = vpop.permute.xlu0 %1369
    %1372 = vset.pattern.permute.xlu0 9
    %1373 = vperm.xlu0 %1372, %v96
    %v1374 = vpop.permute.xlu0 %1373
    %1376 = vset.pattern.permute.xlu0 9
    %1377 = vperm.xlu0 %1376, %v97
    %v1378 = vpop.permute.xlu0 %1377
    %1380 = vset.pattern.permute.xlu0 9
    %1381 = vperm.xlu0 %1380, %v98
    %v1382 = vpop.permute.xlu0 %1381
    %1384 = vset.pattern.permute.xlu0 9
    %1385 = vperm.xlu0 %1384, %v99
    %v1386 = vpop.permute.xlu0 %1385
    %1388 = vset.pattern.permute.xlu0 9
    %1389 = vperm.xlu0 %1388, %v100
    %v1390 = vpop.permute.xlu0 %1389
    %1392 = vset.pattern.permute.xlu0 9
    %1393 = vperm.xlu0 %1392, %v101
    %v1394 = vpop.permute.xlu0 %1393
    %1396 = vset.pattern.permute.xlu0 9
    %1397 = vperm.xlu0 %1396, %v102
    %v1398 = vpop.permute.xlu0 %1397
    %1400 = vset.pattern.permute.xlu0 9
    %1401 = vperm.xlu0 %1400, %v103
    %v1402 = vpop.permute.xlu0 %1401
    %1404 = vset.pattern.permute.xlu0 9
    %1405 = vperm.xlu0 %1404, %v104
    %v1406 = vpop.permute.xlu0 %1405
    %1408 = vset.pattern.permute.xlu0 9
    %1409 = vperm.xlu0 %1408, %v105
    %v1410 = vpop.permute.xlu0 %1409
    %1412 = vset.pattern.permute.xlu0 9
    %1413 = vperm.xlu0 %1412, %v106
    %v1414 = vpop.permute.xlu0 %1413
    %1417 = vset.pattern.permute.xlu0 9
    %1418 = vperm.xlu0 %1417, %v107
    %v1419 = vpop.permute.xlu0 %1418
    %1422 = vset.pattern.permute.xlu0 9
    %1423 = vperm.xlu0 %1422, %v108
    %v1424 = vpop.permute.xlu0 %1423
    %1427 = vset.pattern.permute.xlu0 9
    %1428 = vperm.xlu0 %1427, %v109
    %v1429 = vpop.permute.xlu0 %1428
    %1432 = vset.pattern.permute.xlu0 9
    %1433 = vperm.xlu0 %1432, %v110
    %v1434 = vpop.permute.xlu0 %1433
    %1437 = vset.pattern.permute.xlu0 9
    %1438 = vperm.xlu0 %1437, %v111
    %v1439 = vpop.permute.xlu0 %1438
    %1442 = vset.pattern.permute.xlu0 9
    %1443 = vperm.xlu0 %1442, %v112
    %v1444 = vpop.permute.xlu0 %1443
    %1447 = vset.pattern.permute.xlu0 9
    %1448 = vperm.xlu0 %1447, %v113
    %v1449 = vpop.permute.xlu0 %1448
    %1452 = vset.pattern.permute.xlu0 9
    %1453 = vperm.xlu0 %1452, %v114
    %v1454 = vpop.permute.xlu0 %1453
    %1457 = vset.pattern.permute.xlu0 9
    %1458 = vperm.xlu0 %1457, %v115
    %v1459 = vpop.permute.xlu0 %1458
    %1462 = vset.pattern.permute.xlu0 9
    %1463 = vperm.xlu0 %1462, %v116
    %v1464 = vpop.permute.xlu0 %1463
    %1467 = vset.pattern.permute.xlu0 9
    %1468 = vperm.xlu0 %1467, %v117
    %v1469 = vpop.permute.xlu0 %1468
    %1472 = vset.pattern.permute.xlu0 9
    %1473 = vperm.xlu0 %1472, %v118
    %v1474 = vpop.permute.xlu0 %1473
    %1477 = vset.pattern.permute.xlu0 9
    %1478 = vperm.xlu0 %1477, %v119
    %v1479 = vpop.permute.xlu0 %1478
    %1482 = vset.pattern.permute.xlu0 9
    %1483 = vperm.xlu0 %1482, %v120
    %v1484 = vpop.permute.xlu0 %1483
    %1487 = vset.pattern.permute.xlu0 9
    %1488 = vperm.xlu0 %1487, %v121
    %v1489 = vpop.permute.xlu0 %1488
    %1492 = vset.pattern.permute.xlu0 9
    %1493 = vperm.xlu0 %1492, %v122
    %v1494 = vpop.permute.xlu0 %1493
    %v1528 = vunpack.c.l.b16 %v59
    %v1529 = vunpack.c.l.b16 %v60
    %v1530 = vunpack.c.l.b16 %v61
    %v1531 = vunpack.c.l.b16 %v62
    %v1532 = vunpack.c.l.b16 %v63
    %v1533 = vunpack.c.l.b16 %v64
    %v1534 = vunpack.c.l.b16 %v65
    %v1535 = vunpack.c.l.b16 %v66
    %v1536 = vunpack.c.l.b16 %v67
    %v1537 = vunpack.c.l.b16 %v68
    %v1538 = vunpack.c.l.b16 %v69
    %v1539 = vunpack.c.l.b16 %v70
    %v1540 = vunpack.c.l.b16 %v71
    %v1541 = vunpack.c.l.b16 %v72
    %v1542 = vunpack.c.l.b16 %v73
    %v1543 = vunpack.c.l.b16 %v74
    %v1544 = vunpack.c.l.b16 %v75
    %v1545 = vunpack.c.l.b16 %v76
    %v1546 = vunpack.c.l.b16 %v77
    %v1547 = vunpack.c.l.b16 %v78
    %v1548 = vunpack.c.l.b16 %v79
    %v1549 = vunpack.c.l.b16 %v80
    %v1550 = vunpack.c.l.b16 %v81
    %v1551 = vunpack.c.l.b16 %v82
    %v1552 = vunpack.c.l.b16 %v83
    %v1553 = vunpack.c.l.b16 %v84
    %v1554 = vunpack.c.l.b16 %v85
    %v1555 = vunpack.c.l.b16 %v86
    %v1556 = vunpack.c.l.b16 %v87
    %v1557 = vunpack.c.l.b16 %v88
    %v1558 = vunpack.c.l.b16 %v89
    %v1559 = vunpack.c.l.b16 %v90
    %v1560 = vpack.c.b16 %v1529, %v1528
    %v1561 = vpack.c.b16 %v1531, %v1530
    %v1562 = vpack.c.b16 %v1533, %v1532
    %v1563 = vpack.c.b16 %v1535, %v1534
    %v1564 = vpack.c.b16 %v1537, %v1536
    %v1565 = vpack.c.b16 %v1539, %v1538
    %v1566 = vpack.c.b16 %v1541, %v1540
    %v1567 = vpack.c.b16 %v1543, %v1542
    %v1568 = vpack.c.b16 %v1545, %v1544
    %v1569 = vpack.c.b16 %v1547, %v1546
    %v1570 = vpack.c.b16 %v1549, %v1548
    %v1571 = vpack.c.b16 %v1551, %v1550
    %v1572 = vpack.c.b16 %v1553, %v1552
    %v1573 = vpack.c.b16 %v1555, %v1554
    %v1574 = vpack.c.b16 %v1557, %v1556
    %v1575 = vpack.c.b16 %v1559, %v1558
    %v1577 = vsel %vm165, %v1560, 0
    %v1580 = vsel %vm165, %v1561, 0
    %v1583 = vsel %vm165, %v1562, 0
    %v1586 = vsel %vm165, %v1563, 0
    %v1589 = vsel %vm165, %v1564, 0
    %v1592 = vsel %vm165, %v1565, 0
    %v1595 = vsel %vm165, %v1566, 0
    %v1598 = vsel %vm165, %v1567, 0
    %v1601 = vsel %vm165, %v1568, 0
    %v1604 = vsel %vm165, %v1569, 0
    %v1607 = vsel %vm165, %v1570, 0
    %v1610 = vsel %vm165, %v1571, 0
    %v1613 = vsel %vm165, %v1572, 0
    %v1616 = vsel %vm165, %v1573, 0
    %v1619 = vsel %vm165, %v1574, 0
    %v1622 = vsel %vm165, %v1575, 0
    %1624 = vmatprep.subr.bf16.mxu0 0
    %1625 = vmatpush1.bf16.msra.mxu0 0
    %1626 = vmatprep.subr.bf16.mxu0 0
    %1627 = vmatpush1.bf16.msra.mxu0 0
    %1628 = vmatprep.subr.bf16.mxu0 0
    %1629 = vmatpush1.bf16.msra.mxu0 0
    %1630 = vmatprep.subr.bf16.mxu0 0
    %1631 = vmatpush1.bf16.msra.mxu0 0
    %1632 = vmatprep.subr.bf16.mxu0 0
    %1633 = vmatpush1.bf16.msra.mxu0 0
    %1634 = vmatprep.subr.bf16.mxu0 0
    %1635 = vmatpush1.bf16.msra.mxu0 0
    %1636 = vmatprep.subr.bf16.mxu0 0
    %1637 = vmatpush1.bf16.msra.mxu0 %v1351
    %1638 = vmatprep.subr.bf16.mxu0 0
    %1639 = vmatpush1.bf16.msra.mxu0 %v1350
    %1640 = vmatprep.subr.bf16.mxu0 0
    %1641 = vmatpush2.bf16.msra.mxu0 0
    %1642 = vmatprep.subr.bf16.mxu0 0
    %1643 = vmatpush2.bf16.msra.mxu0 0
    %1644 = vmatprep.subr.bf16.mxu0 0
    %1645 = vmatpush2.bf16.msra.mxu0 0
    %1646 = vmatprep.subr.bf16.mxu0 0
    %1647 = vmatpush2.bf16.msra.mxu0 0
    %1648 = vmatprep.subr.bf16.mxu0 0
    %1649 = vmatpush2.bf16.msra.mxu0 0
    %1650 = vmatprep.subr.bf16.mxu0 0
    %1651 = vmatpush2.bf16.msra.mxu0 0
    %1652 = vmatprep.subr.bf16.mxu0 0
    %1653 = vmatpush2.bf16.msra.mxu0 0
    %1654 = vmatprep.subr.bf16.mxu0 0
    %1655 = vmatpush2.bf16.msra.mxu0 0
    %1656 = vmatprep.mubr.bf16.mxu0 0
    %1657 = vmatmul.mubr.bf16.gmra.mxu0 %v1577
    %v1658 = vpop.f32.mrf.mxu0
    %v1659 = vadd.f32 %v1354, %v1658
    %v1660 = vpop.f32.mrf.mxu0
    %v1661 = vpop.f32.mrf.mxu0
    %v1662 = vadd.f32 %v1358, %v1661
    %v1663 = vpop.f32.mrf.mxu0
    %1664 = vmatprep.mubr.bf16.mxu0 0
    %1665 = vmatmul.mubr.bf16.gmra.mxu0 %v1580
    %v1666 = vpop.f32.mrf.mxu0
    %v1667 = vadd.f32 %v1362, %v1666
    %v1668 = vpop.f32.mrf.mxu0
    %v1669 = vpop.f32.mrf.mxu0
    %v1670 = vadd.f32 %v1366, %v1669
    %v1671 = vpop.f32.mrf.mxu0
    %1672 = vmatprep.mubr.bf16.mxu0 0
    %1673 = vmatmul.mubr.bf16.gmra.mxu0 %v1583
    %v1674 = vpop.f32.mrf.mxu0
    %v1675 = vadd.f32 %v1370, %v1674
    %v1676 = vpop.f32.mrf.mxu0
    %v1677 = vpop.f32.mrf.mxu0
    %v1678 = vadd.f32 %v1374, %v1677
    %v1679 = vpop.f32.mrf.mxu0
    %1680 = vmatprep.mubr.bf16.mxu0 0
    %1681 = vmatmul.mubr.bf16.gmra.mxu0 %v1586
    %v1682 = vpop.f32.mrf.mxu0
    %v1683 = vadd.f32 %v1378, %v1682
    %v1684 = vpop.f32.mrf.mxu0
    %v1685 = vpop.f32.mrf.mxu0
    %v1686 = vadd.f32 %v1382, %v1685
    %v1687 = vpop.f32.mrf.mxu0
    %1688 = vmatprep.mubr.bf16.mxu0 0
    %1689 = vmatmul.mubr.bf16.gmra.mxu0 %v1589
    %v1690 = vpop.f32.mrf.mxu0
    %v1691 = vadd.f32 %v1386, %v1690
    %v1692 = vpop.f32.mrf.mxu0
    %v1693 = vpop.f32.mrf.mxu0
    %v1694 = vadd.f32 %v1390, %v1693
    %v1695 = vpop.f32.mrf.mxu0
    %1696 = vmatprep.mubr.bf16.mxu0 0
    %1697 = vmatmul.mubr.bf16.gmra.mxu0 %v1592
    %v1698 = vpop.f32.mrf.mxu0
    %v1699 = vadd.f32 %v1394, %v1698
    %v1700 = vpop.f32.mrf.mxu0
    %v1701 = vpop.f32.mrf.mxu0
    %v1702 = vadd.f32 %v1398, %v1701
    %v1703 = vpop.f32.mrf.mxu0
    %1704 = vmatprep.mubr.bf16.mxu0 0
    %1705 = vmatmul.mubr.bf16.gmra.mxu0 %v1595
    %v1706 = vpop.f32.mrf.mxu0
    %v1707 = vadd.f32 %v1402, %v1706
    %v1708 = vpop.f32.mrf.mxu0
    %v1709 = vpop.f32.mrf.mxu0
    %v1710 = vadd.f32 %v1406, %v1709
    %v1711 = vpop.f32.mrf.mxu0
    %1712 = vmatprep.mubr.bf16.mxu0 0
    %1713 = vmatmul.mubr.bf16.gmra.mxu0 %v1598
    %v1714 = vpop.f32.mrf.mxu0
    %v1715 = vadd.f32 %v1410, %v1714
    %v1716 = vpop.f32.mrf.mxu0
    %v1717 = vpop.f32.mrf.mxu0
    %v1718 = vadd.f32 %v1414, %v1717
    %v1719 = vpop.f32.mrf.mxu0
    %1720 = vmatprep.mubr.bf16.mxu0 0
    %1721 = vmatmul.mubr.bf16.gmra.mxu0 %v1601
    %v1722 = vpop.f32.mrf.mxu0
    %v1723 = vadd.f32 %v1419, %v1722
    %v1724 = vpop.f32.mrf.mxu0
    %v1725 = vpop.f32.mrf.mxu0
    %v1726 = vadd.f32 %v1424, %v1725
    %v1727 = vpop.f32.mrf.mxu0
    %1728 = vmatprep.mubr.bf16.mxu0 0
    %1729 = vmatmul.mubr.bf16.gmra.mxu0 %v1604
    %v1730 = vpop.f32.mrf.mxu0
    %v1731 = vadd.f32 %v1429, %v1730
    %v1732 = vpop.f32.mrf.mxu0
    %v1733 = vpop.f32.mrf.mxu0
    %v1734 = vadd.f32 %v1434, %v1733
    %v1735 = vpop.f32.mrf.mxu0
    %1736 = vmatprep.mubr.bf16.mxu0 0
    %1737 = vmatmul.mubr.bf16.gmra.mxu0 %v1607
    %v1738 = vpop.f32.mrf.mxu0
    %v1739 = vadd.f32 %v1439, %v1738
    %v1740 = vpop.f32.mrf.mxu0
    %v1741 = vpop.f32.mrf.mxu0
    %v1742 = vadd.f32 %v1444, %v1741
    %v1743 = vpop.f32.mrf.mxu0
    %1744 = vmatprep.mubr.bf16.mxu0 0
    %1745 = vmatmul.mubr.bf16.gmra.mxu0 %v1610
    %v1746 = vpop.f32.mrf.mxu0
    %v1747 = vadd.f32 %v1449, %v1746
    %v1748 = vpop.f32.mrf.mxu0
    %v1749 = vpop.f32.mrf.mxu0
    %v1750 = vadd.f32 %v1454, %v1749
    %v1751 = vpop.f32.mrf.mxu0
    %1752 = vmatprep.mubr.bf16.mxu0 0
    %1753 = vmatmul.mubr.bf16.gmra.mxu0 %v1613
    %v1754 = vpop.f32.mrf.mxu0
    %v1755 = vadd.f32 %v1459, %v1754
    %v1756 = vpop.f32.mrf.mxu0
    %v1757 = vpop.f32.mrf.mxu0
    %v1758 = vadd.f32 %v1464, %v1757
    %v1759 = vpop.f32.mrf.mxu0
    %1760 = vmatprep.mubr.bf16.mxu0 0
    %1761 = vmatmul.mubr.bf16.gmra.mxu0 %v1616
    %v1762 = vpop.f32.mrf.mxu0
    %v1763 = vadd.f32 %v1469, %v1762
    %v1764 = vpop.f32.mrf.mxu0
    %v1765 = vpop.f32.mrf.mxu0
    %v1766 = vadd.f32 %v1474, %v1765
    %v1767 = vpop.f32.mrf.mxu0
    %1768 = vmatprep.mubr.bf16.mxu0 0
    %1769 = vmatmul.mubr.bf16.gmra.mxu0 %v1619
    %v1770 = vpop.f32.mrf.mxu0
    %v1771 = vadd.f32 %v1479, %v1770
    %v1772 = vpop.f32.mrf.mxu0
    %v1773 = vpop.f32.mrf.mxu0
    %v1774 = vadd.f32 %v1484, %v1773
    %v1775 = vpop.f32.mrf.mxu0
    %1776 = vmatprep.mubr.bf16.mxu0 0
    %1777 = vmatmul.mubr.bf16.gmra.mxu0 %v1622
    %v1778 = vpop.f32.mrf.mxu0
    %v1779 = vadd.f32 %v1489, %v1778
    %v1780 = vpop.f32.mrf.mxu0
    %v1781 = vpop.f32.mrf.mxu0
    %v1782 = vadd.f32 %v1494, %v1781
    %v1783 = vpop.f32.mrf.mxu0
    %1784 = vdwg.mxu0
    %v1785 = vmax.f32 %v1659, 0.0
    %v1786 = vmax.f32 %v1662, 0.0
    %v1787 = vmax.f32 %v1667, 0.0
    %v1788 = vmax.f32 %v1670, 0.0
    %v1789 = vmax.f32 %v1675, 0.0
    %v1790 = vmax.f32 %v1678, 0.0
    %v1791 = vmax.f32 %v1683, 0.0
    %v1792 = vmax.f32 %v1686, 0.0
    %v1793 = vmax.f32 %v1691, 0.0
    %v1794 = vmax.f32 %v1694, 0.0
    %v1795 = vmax.f32 %v1699, 0.0
    %v1796 = vmax.f32 %v1702, 0.0
    %v1797 = vmax.f32 %v1707, 0.0
    %v1798 = vmax.f32 %v1710, 0.0
    %v1799 = vmax.f32 %v1715, 0.0
    %v1800 = vmax.f32 %v1718, 0.0
    %v1801 = vmax.f32 %v1723, 0.0
    %v1802 = vmax.f32 %v1726, 0.0
    %v1803 = vmax.f32 %v1731, 0.0
    %v1804 = vmax.f32 %v1734, 0.0
    %v1805 = vmax.f32 %v1739, 0.0
    %v1806 = vmax.f32 %v1742, 0.0
    %v1807 = vmax.f32 %v1747, 0.0
    %v1808 = vmax.f32 %v1750, 0.0
    %v1809 = vmax.f32 %v1755, 0.0
    %v1810 = vmax.f32 %v1758, 0.0
    %v1811 = vmax.f32 %v1763, 0.0
    %v1812 = vmax.f32 %v1766, 0.0
    %v1813 = vmax.f32 %v1771, 0.0
    %v1814 = vmax.f32 %v1774, 0.0
    %v1815 = vmax.f32 %v1779, 0.0
    %v1816 = vmax.f32 %v1782, 0.0
    %v1817 = vld [vmem:[%s2] sm:$0xff]
    %v1818 = vpack.c.bf16 %v1786, %v1785
    %v1819 = vpack.c.bf16 %v1788, %v1787
    %v1820 = vpack.c.bf16 %v1790, %v1789
    %v1821 = vpack.c.bf16 %v1792, %v1791
    %v1822 = vpack.c.bf16 %v1794, %v1793
    %v1823 = vpack.c.bf16 %v1796, %v1795
    %v1824 = vpack.c.bf16 %v1798, %v1797
    %v1825 = vpack.c.bf16 %v1800, %v1799
    %v1826 = vpack.c.bf16 %v1802, %v1801
    %v1827 = vpack.c.bf16 %v1804, %v1803
    %v1828 = vpack.c.bf16 %v1806, %v1805
    %v1829 = vpack.c.bf16 %v1808, %v1807
    %v1830 = vpack.c.bf16 %v1810, %v1809
    %v1831 = vpack.c.bf16 %v1812, %v1811
    %v1832 = vpack.c.bf16 %v1814, %v1813
    %v1833 = vpack.c.bf16 %v1816, %v1815
    %1834 = vset.pattern.permute.xlu0 10
    %1835 = vperm.xlu0 %1834, %v91
    %v1836 = vpop.permute.xlu0 %1835
    %v1839 = vunpack.c.l.b16 %v1817
    %v1840 = vunpack.c.h.b16 %v1817
    %v1841 = vpack.c.b16 %v1839, %v1839
    %v1842 = vpack.c.b16 %v1840, %v1840
    %1845 = vmatprep.subr.bf16.mxu0 0
    %1846 = vmatpush1.bf16.msra.mxu0 %v1825
    %1847 = vmatprep.subr.bf16.mxu0 0
    %1848 = vmatpush1.bf16.msra.mxu0 %v1824
    %1849 = vmatprep.subr.bf16.mxu0 0
    %1850 = vmatpush1.bf16.msra.mxu0 %v1823
    %1851 = vmatprep.subr.bf16.mxu0 0
    %1852 = vmatpush1.bf16.msra.mxu0 %v1822
    %1853 = vmatprep.subr.bf16.mxu0 0
    %1854 = vmatpush1.bf16.msra.mxu0 %v1821
    %1855 = vmatprep.subr.bf16.mxu0 0
    %1856 = vmatpush1.bf16.msra.mxu0 %v1820
    %1857 = vmatprep.subr.bf16.mxu0 0
    %1858 = vmatpush1.bf16.msra.mxu0 %v1819
    %1859 = vmatprep.subr.bf16.mxu0 0
    %1860 = vmatpush1.bf16.msra.mxu0 %v1818
    %1861 = vmatprep.subr.bf16.mxu0 0
    %1862 = vmatpush2.bf16.msra.mxu0 %v1833
    %1863 = vmatprep.subr.bf16.mxu0 0
    %1864 = vmatpush2.bf16.msra.mxu0 %v1832
    %1865 = vmatprep.subr.bf16.mxu0 0
    %1866 = vmatpush2.bf16.msra.mxu0 %v1831
    %1867 = vmatprep.subr.bf16.mxu0 0
    %1868 = vmatpush2.bf16.msra.mxu0 %v1830
    %1869 = vmatprep.subr.bf16.mxu0 0
    %1870 = vmatpush2.bf16.msra.mxu0 %v1829
    %1871 = vmatprep.subr.bf16.mxu0 0
    %1872 = vmatpush2.bf16.msra.mxu0 %v1828
    %1873 = vmatprep.subr.bf16.mxu0 0
    %1874 = vmatpush2.bf16.msra.mxu0 %v1827
    %1875 = vmatprep.subr.bf16.mxu0 0
    %1876 = vmatpush2.bf16.msra.mxu0 %v1826
    %1877 = vmatprep.mubr.bf16.mxu0 %v1842
    %1878 = vmatmul.mubr.bf16.gmra.mxu0 %v1841
    %v1879 = vpop.f32.mrf.mxu0
    %v1880 = vadd.f32 %v1836, %v1879
    %v1881 = vpop.f32.mrf.mxu0
    %v1882 = vpop.f32.mrf.mxu0
    %v1883 = vpop.f32.mrf.mxu0
    %1884 = vdwg.mxu0
    %1885 = vst [vmem:[#allocation2] sm:$0xff] %v1880
    // Predicated region
    $region18: #{tpu_custom_call.1} parent=1 // pred_check
      _
    $region19: #{tpu_custom_call.1} parent=1 // pred_check_branch
      %1887 = sbr.rel (0) target = $region21
    $region20: #{tpu_custom_call.1} parent=1 // pred_region
      %s1889 = ssub.s32 128, 128
      %1890 = vsyncadd [#allocation3], %s1889
      %s1892 = sshll.u32 [#allocation2], 4
      %s1893 = int_to_ptr.vmem [resolvable:$true] %s1892
      %1895 = dma.vmem_to_hbm [thread:$0]  %s1893, 128, %s4, [#allocation3]
    $region21: #{tpu_custom_call.1} parent=1 // pred_fallthru
      _
    // Predicated region
    $region22: #{tpu_custom_call.1} parent=1 // pred_check
      _
    $region23: #{tpu_custom_call.1} parent=1 // pred_check_branch
      %1897 = sbr.rel (0) target = $region25
    $region24: #{tpu_custom_call.1} parent=1 // pred_region
      %1898 = dma.done [#allocation3], 128
    $region25: #{tpu_custom_call.1} parent=1 // pred_fallthru
      _
    %1899 = vsyncpa [#allocation3], 1

</llo_original>
